<compile_context>
chip_gen: v7x
topology: tpu7x:2x2x1
jax: 0.10.0
libtpu: 0.0.40
codegen_flags: <defaults>
</compile_context>

<pallas_src>
import jax
import jax.numpy as jnp
from jax import lax
from jax.experimental import pallas as pl
from jax.experimental.pallas import tpu as pltpu


def _round_up(x, m):
    return (x + m - 1) // m * m


# ---------------------------------------------------------------------------
# XLA-side marshalling helpers (cheap: only the un-expanded input is transposed).
# ---------------------------------------------------------------------------
def _im2col_pool_slab(x_bchw, k_pad):
    """(B, C, H, W) -> (B, 4, k_pad, (H//2)*(W//2)) bf16 im2col+pool slab.

    slab[b, py*2+px, (ky*3+kx)*C+ci, ho*(W//2)+wo] = xpad[b, ci, 2*ho+py+ky, 2*wo+px+kx]

    Built via a 2x2 phase decomposition of the padded (un-expanded) input, so the
    only transpose runs over the original activation; the 9x-expanded slab is
    written once by shifted-slice stacking (no 7-D transpose of expanded data).
    """
    B, C, H, W = x_bchw.shape
    Ho, Wo = H // 2, W // 2
    xp = jnp.pad(x_bchw, ((0, 0), (0, 0), (1, 1), (1, 1)))          # (B,C,H+2,W+2)
    # xph[b, a, bb, c, r, cc] = xp[b, c, 2r+a, 2cc+bb]
    xph = xp.reshape(B, C, Ho + 1, 2, Wo + 1, 2).transpose(0, 3, 5, 1, 2, 4)
    phases = []
    for py in range(2):
        for px in range(2):
            taps = []
            for ky in range(3):
                for kx in range(3):
                    s, t = py + ky, px + kx
                    taps.append(xph[:, s % 2, t % 2, :,
                                    s // 2: s // 2 + Ho,
                                    t // 2: t // 2 + Wo])            # (B,C,Ho,Wo)
            phases.append(jnp.stack(taps, axis=1))                   # (B,9,C,Ho,Wo)
    slab = jnp.stack(phases, axis=1).reshape(B, 4, 9 * C, Ho * Wo)   # (B,4,9C,HoWo)
    if k_pad > 9 * C:
        slab = jnp.pad(slab, ((0, 0), (0, 0), (0, k_pad - 9 * C), (0, 0)))
    return slab.astype(jnp.bfloat16)


def _flatten_conv_weight(w_oihw, k_pad):
    """(Cout,Cin,3,3) -> (Cout, k_pad) bf16, column index (ky*3+kx)*Cin + ci."""
    Cout, Cin = w_oihw.shape[:2]
    wf = jnp.transpose(w_oihw, (0, 2, 3, 1)).reshape(Cout, 9 * Cin)
    if k_pad > 9 * Cin:
        wf = jnp.pad(wf, ((0, 0), (0, k_pad - 9 * Cin)))
    return wf.astype(jnp.bfloat16)


# ---------------------------------------------------------------------------
# Kernel 1: conv3x3(pad=1) + bias + ReLU + 2x2 maxpool, one image per grid step.
#   x_ref: (4, Kp, N) bf16, w_ref: (Cout, Kp) bf16, b_ref: (Cout,1) f32,
#   o_ref: (Cout, N) bf16.
# relu(max_p(W@X_p)+b) == maxpool(relu(conv+b)): bias shared across pool
# offsets and ReLU monotone.
# ---------------------------------------------------------------------------
def conv_relu_pool_kernel(x_ref, w_ref, b_ref, o_ref):
    w = w_ref[...]
    acc = jnp.dot(w, x_ref[0], preferred_element_type=jnp.float32)
    for p in range(1, 4):  # static unroll: one MXU matmul per pool offset
        acc = jnp.maximum(
            acc, jnp.dot(w, x_ref[p], preferred_element_type=jnp.float32))
    o_ref[...] = jnp.maximum(acc + b_ref[...], 0.0).astype(o_ref.dtype)


def conv_relu_pool(slab, w_flat, b_col, cout, n):
    B, _, kp, _ = slab.shape
    return pl.pallas_call(
        conv_relu_pool_kernel,
        out_shape=jax.ShapeDtypeStruct((B, cout, n), jnp.bfloat16),
        grid=(B,),
        in_specs=[
            pl.BlockSpec((pl.Squeezed(), 4, kp, n), lambda i: (i, 0, 0, 0)),
            pl.BlockSpec((cout, kp), lambda i: (0, 0)),
            pl.BlockSpec((cout, 1), lambda i: (0, 0)),
        ],
        out_specs=pl.BlockSpec((pl.Squeezed(), cout, n), lambda i: (i, 0, 0)),
        compiler_params=pltpu.CompilerParams(
            dimension_semantics=("parallel",),
            vmem_limit_bytes=32 * 1024 * 1024),
    )(slab, w_flat, b_col)


# ---------------------------------------------------------------------------
# Kernel 2: conv3x3(pad=1) + bias + ReLU + 2x2 maxpool + fc head, fused.
# The pooled (C2, N2) activation stays in registers/VMEM; only the
# (num_classes, 1) logits column is stored to HBM.
#   x_ref: (4, Kp, N2) bf16, w_ref: (C2, Kp) bf16, b_ref: (C2,1) f32,
#   wf_ref: (K, C2, N2) f32, bf_ref: (K,1) f32, o_ref: (K,1) f32.
# ---------------------------------------------------------------------------
def conv_relu_pool_fc_kernel(x_ref, w_ref, b_ref, wf_ref, bf_ref, o_ref):
    w = w_ref[...]
    acc = jnp.dot(w, x_ref[0], preferred_element_type=jnp.float32)
    for p in range(1, 4):
        acc = jnp.maximum(
            acc, jnp.dot(w, x_ref[p], preferred_element_type=jnp.float32))
    act2 = jnp.maximum(acc + b_ref[...], 0.0)                 # (C2, N2) f32

    # fc head: logits[k] = sum_{c,n} wf[k,c,n] * act2[c,n] + bf[k]
    # ~20K MACs/image: VPU multiply + two minor-axis reductions (MXU irrelevant).
    partial = jnp.sum(wf_ref[...] * act2[None, :, :], axis=-1)        # (K, C2)
    o_ref[...] = jnp.sum(partial, axis=-1, keepdims=True) + bf_ref[...]


def conv_relu_pool_fc(slab, w_flat, b_col, wf_r, bf_col):
    B, _, kp, n = slab.shape
    c2 = w_flat.shape[0]
    k = wf_r.shape[0]
    return pl.pallas_call(
        conv_relu_pool_fc_kernel,
        out_shape=jax.ShapeDtypeStruct((B, k, 1), jnp.float32),
        grid=(B,),
        in_specs=[
            pl.BlockSpec((pl.Squeezed(), 4, kp, n), lambda i: (i, 0, 0, 0)),
            pl.BlockSpec((c2, kp), lambda i: (0, 0)),
            pl.BlockSpec((c2, 1), lambda i: (0, 0)),
            pl.BlockSpec((k, c2, n), lambda i: (0, 0, 0)),
            pl.BlockSpec((k, 1), lambda i: (0, 0)),
        ],
        out_specs=pl.BlockSpec((pl.Squeezed(), k, 1), lambda i: (i, 0, 0)),
        compiler_params=pltpu.CompilerParams(
            dimension_semantics=("parallel",),
            vmem_limit_bytes=32 * 1024 * 1024),
    )(slab, w_flat, b_col, wf_r, bf_col)


# ---------------------------------------------------------------------------
# Full forward pass (Pallas) and a pure-JAX reference for validation.
# ---------------------------------------------------------------------------
def simple_cnn_forward(x_nchw, params):
    cw1, cb1, cw2, cb2, fw, fb = params
    B, cin, H, W = x_nchw.shape
    assert H % 4 == 0 and W % 4 == 0, "layout assumes H, W divisible by 4"
    c1, c2 = cw1.shape[0], cw2.shape[0]
    H1, W1 = H // 2, W // 2
    H2, W2 = H // 4, W // 4
    num_classes = fw.shape[0]

    k1p = _round_up(9 * cin, 16)   # bf16 sublane-tile friendly K
    k2p = _round_up(9 * c1, 16)

    # Layer 1: conv + bias + ReLU + pool (bf16 channel-major output).
    slab1 = _im2col_pool_slab(x_nchw, k1p)                         # (B,4,k1p,H1*W1)
    w1f = _flatten_conv_weight(cw1, k1p)
    act1 = conv_relu_pool(slab1, w1f, cb1.reshape(c1, 1).astype(jnp.float32),
                          c1, H1 * W1)                             # (B,c1,H1*W1) bf16

    # Layer 2 + fc head, fused. Channel-major layout makes the PyTorch NCHW
    # .view(B,-1) flatten == c*H2*W2 + spatial, so fc weight is just reshaped.
    slab2 = _im2col_pool_slab(act1.reshape(B, c1, H1, W1), k2p)    # (B,4,k2p,H2*W2)
    w2f = _flatten_conv_weight(cw2, k2p)
    wf_r = fw.reshape(num_classes, c2, H2 * W2).astype(jnp.float32)
    logits = conv_relu_pool_fc(slab2, w2f, cb2.reshape(c2, 1).astype(jnp.float32),
                               wf_r, fb.reshape(num_classes, 1).astype(jnp.float32))
    return logits.reshape(B, num_classes)


def reference_forward(x_nchw, params):
    cw1, cb1, cw2, cb2, fw, fb = params
    dn = ("NCHW", "OIHW", "NCHW")

    def conv_block(x, w, b):
        y = lax.conv_general_dilated(x, w, (1, 1), [(1, 1), (1, 1)],
                                     dimension_numbers=dn)
        y = jnp.maximum(y + b[None, :, None, None], 0.0)
        return lax.reduce_window(y, -jnp.inf, lax.max,
                                 (1, 1, 2, 2), (1, 1, 2, 2), "VALID")

    out = conv_block(x_nchw, cw1, cb1)
    out = conv_block(out, cw2, cb2)
    out = out.reshape(out.shape[0], -1)
    return out @ fw.T + fb


if __name__ == "__main__":
    # NOTE: the PyTorch fc (32*56*56) implies a 224x224 input; per instructions
    # we use a small 32x32 input, so fc in-features = 32 * 8 * 8 = 2048.
    B, CIN, HW_IN = 2, 3, 32
    NUM_CLASSES = 10
    FC_IN = 32 * (HW_IN // 4) * (HW_IN // 4)   # 2048

    key = jax.random.PRNGKey(0)
    k0, k1, k2, k3, k4, k5, k6 = jax.random.split(key, 7)

    x = jax.random.normal(k0, (B, CIN, HW_IN, HW_IN), jnp.float32)
    w1 = jax.random.normal(k1, (16, CIN, 3, 3), jnp.float32) * 0.05
    b1 = jax.random.normal(k2, (16,), jnp.float32) * 0.05
    w2 = jax.random.normal(k3, (32, 16, 3, 3), jnp.float32) * 0.05
    b2 = jax.random.normal(k4, (32,), jnp.float32) * 0.05
    wf = jax.random.normal(k5, (NUM_CLASSES, FC_IN), jnp.float32) * 0.02
    bf = jax.random.normal(k6, (NUM_CLASSES,), jnp.float32) * 0.02
    params = (w1, b1, w2, b2, wf, bf)

    fwd = jax.jit(simple_cnn_forward)
    out = jax.block_until_ready(fwd(x, params))
    ref = jax.block_until_ready(reference_forward(x, params))

    assert out.shape == (B, NUM_CLASSES), out.shape
    max_err = float(jnp.max(jnp.abs(out - ref)))
    scale = float(jnp.max(jnp.abs(ref))) + 1.0
    # bf16 MXU operands / bf16 intermediate activation: 2% relative tolerance.
    assert max_err < 2e-2 * scale, f"mismatch vs reference: {max_err}"

    print("KERNEL_OK")
</pallas_src>

<mosaic_0001>
module attributes {stable_mosaic.version = 11 : i64} {
  func.func @conv_relu_pool_kernel(%arg0: i32, %arg1: memref<1x4x32x256xbf16, #tpu.memory_space<vmem>>, %arg2: memref<16x32xbf16, #tpu.memory_space<vmem>>, %arg3: memref<16x1xf32, #tpu.memory_space<vmem>>, %arg4: memref<1x16x256xbf16, #tpu.memory_space<vmem>>) attributes {dimension_semantics = [#tpu.dimension_semantics<parallel>], iteration_bounds = array<i64: 2>, scalar_prefetch = 0 : i64, scratch_operands = 0 : i64, tpu.core_type = #tpu.core_type<tc>, window_params = [{transform_indices = @transform_0, window_bounds = array<i64: 1, 4, 32, 256>}, {pipeline_mode = #tpu.pipeline_mode<synchronous>, transform_indices = @transform_1, window_bounds = array<i64: 16, 32>}, {pipeline_mode = #tpu.pipeline_mode<synchronous>, transform_indices = @transform_2, window_bounds = array<i64: 16, 1>}, {transform_indices = @transform_3, window_bounds = array<i64: 1, 16, 256>}]} {
    %c0 = arith.constant 0 : index
    %c0_0 = arith.constant 0 : index
    %0 = vector.load %arg2[%c0, %c0_0] : memref<16x32xbf16, #tpu.memory_space<vmem>>, vector<16x32xbf16>
    %c0_1 = arith.constant 0 : index
    %c0_2 = arith.constant 0 : index
    %c0_3 = arith.constant 0 : index
    %c0_4 = arith.constant 0 : index
    %1 = vector.load %arg1[%c0_1, %c0_2, %c0_3, %c0_4] : memref<1x4x32x256xbf16, #tpu.memory_space<vmem>>, vector<1x1x32x256xbf16>
    %2 = vector.shape_cast %1 : vector<1x1x32x256xbf16> to vector<32x256xbf16>
    %cst = arith.constant dense<0.000000e+00> : vector<16x256xf32>
    %3 = tpu.matmul %0, %2, %cst {dimension_numbers = #tpu.dot_dimension_numbers<[1], [0], [0], [1], [0, 0, 1, 1], [], []>} : vector<16x32xbf16>, vector<32x256xbf16>, vector<16x256xf32> -> vector<16x256xf32>
    %c0_5 = arith.constant 0 : index
    %c1 = arith.constant 1 : index
    %c0_6 = arith.constant 0 : index
    %c0_7 = arith.constant 0 : index
    %4 = vector.load %arg1[%c0_5, %c1, %c0_6, %c0_7] : memref<1x4x32x256xbf16, #tpu.memory_space<vmem>>, vector<1x1x32x256xbf16>
    %5 = vector.shape_cast %4 : vector<1x1x32x256xbf16> to vector<32x256xbf16>
    %cst_8 = arith.constant dense<0.000000e+00> : vector<16x256xf32>
    %6 = tpu.matmul %0, %5, %cst_8 {dimension_numbers = #tpu.dot_dimension_numbers<[1], [0], [0], [1], [0, 0, 1, 1], [], []>} : vector<16x32xbf16>, vector<32x256xbf16>, vector<16x256xf32> -> vector<16x256xf32>
    %7 = arith.maximumf %3, %6 : vector<16x256xf32>
    %c0_9 = arith.constant 0 : index
    %c2 = arith.constant 2 : index
    %c0_10 = arith.constant 0 : index
    %c0_11 = arith.constant 0 : index
    %8 = vector.load %arg1[%c0_9, %c2, %c0_10, %c0_11] : memref<1x4x32x256xbf16, #tpu.memory_space<vmem>>, vector<1x1x32x256xbf16>
    %9 = vector.shape_cast %8 : vector<1x1x32x256xbf16> to vector<32x256xbf16>
    %cst_12 = arith.constant dense<0.000000e+00> : vector<16x256xf32>
    %10 = tpu.matmul %0, %9, %cst_12 {dimension_numbers = #tpu.dot_dimension_numbers<[1], [0], [0], [1], [0, 0, 1, 1], [], []>} : vector<16x32xbf16>, vector<32x256xbf16>, vector<16x256xf32> -> vector<16x256xf32>
    %11 = arith.maximumf %7, %10 : vector<16x256xf32>
    %c0_13 = arith.constant 0 : index
    %c3 = arith.constant 3 : index
    %c0_14 = arith.constant 0 : index
    %c0_15 = arith.constant 0 : index
    %12 = vector.load %arg1[%c0_13, %c3, %c0_14, %c0_15] : memref<1x4x32x256xbf16, #tpu.memory_space<vmem>>, vector<1x1x32x256xbf16>
    %13 = vector.shape_cast %12 : vector<1x1x32x256xbf16> to vector<32x256xbf16>
    %cst_16 = arith.constant dense<0.000000e+00> : vector<16x256xf32>
    %14 = tpu.matmul %0, %13, %cst_16 {dimension_numbers = #tpu.dot_dimension_numbers<[1], [0], [0], [1], [0, 0, 1, 1], [], []>} : vector<16x32xbf16>, vector<32x256xbf16>, vector<16x256xf32> -> vector<16x256xf32>
    %15 = arith.maximumf %11, %14 : vector<16x256xf32>
    %c0_17 = arith.constant 0 : index
    %c0_18 = arith.constant 0 : index
    %16 = vector.load %arg3[%c0_17, %c0_18] : memref<16x1xf32, #tpu.memory_space<vmem>>, vector<16x1xf32>
    %17 = vector.broadcast %16 : vector<16x1xf32> to vector<16x256xf32>
    %18 = arith.addf %15, %17 : vector<16x256xf32>
    %cst_19 = arith.constant 0.000000e+00 : f32
    %19 = vector.broadcast %cst_19 : f32 to vector<16x256xf32>
    %20 = arith.maximumf %18, %19 : vector<16x256xf32>
    %21 = arith.truncf %20 : vector<16x256xf32> to vector<16x256xbf16>
    %c0_20 = arith.constant 0 : index
    %c0_21 = arith.constant 0 : index
    %c0_22 = arith.constant 0 : index
    %22 = vector.load %arg4[%c0_20, %c0_21, %c0_22] : memref<1x16x256xbf16, #tpu.memory_space<vmem>>, vector<1x16x256xbf16>
    %23 = vector.shape_cast %22 : vector<1x16x256xbf16> to vector<16x256xbf16>
    %24 = vector.shape_cast %21 : vector<16x256xbf16> to vector<1x16x256xbf16>
    tpu.vector_store %arg4[%c0_20, %c0_21, %c0_22], %24 {strides = array<i32>} : memref<1x16x256xbf16, #tpu.memory_space<vmem>>, vector<1x16x256xbf16>,
    return
  }
  func.func @transform_0(%arg0: i32) -> (i32, i32, i32, i32) {
    %c0_i32 = arith.constant 0 : i32
    %c0_i32_0 = arith.constant 0 : i32
    %c0_i32_1 = arith.constant 0 : i32
    %c0_i32_2 = arith.constant 0 : i32
    return %arg0, %c0_i32, %c0_i32_0, %c0_i32_1 : i32, i32, i32, i32
  }
  func.func @transform_1(%arg0: i32) -> (i32, i32) {
    %c0_i32 = arith.constant 0 : i32
    %c0_i32_0 = arith.constant 0 : i32
    %c0_i32_1 = arith.constant 0 : i32
    return %c0_i32, %c0_i32_0 : i32, i32
  }
  func.func @transform_2(%arg0: i32) -> (i32, i32) {
    %c0_i32 = arith.constant 0 : i32
    %c0_i32_0 = arith.constant 0 : i32
    %c0_i32_1 = arith.constant 0 : i32
    return %c0_i32, %c0_i32_0 : i32, i32
  }
  func.func @transform_3(%arg0: i32) -> (i32, i32, i32) {
    %c0_i32 = arith.constant 0 : i32
    %c0_i32_0 = arith.constant 0 : i32
    %c0_i32_1 = arith.constant 0 : i32
    return %arg0, %c0_i32, %c0_i32_0 : i32, i32, i32
  }
}

module attributes {stable_mosaic.version = 11 : i64} {
  func.func @conv_relu_pool_fc_kernel(%arg0: i32, %arg1: memref<1x4x144x64xbf16, #tpu.memory_space<vmem>>, %arg2: memref<32x144xbf16, #tpu.memory_space<vmem>>, %arg3: memref<32x1xf32, #tpu.memory_space<vmem>>, %arg4: memref<10x32x64xf32, #tpu.memory_space<vmem>>, %arg5: memref<10x1xf32, #tpu.memory_space<vmem>>, %arg6: memref<1x10x1xf32, #tpu.memory_space<vmem>>) attributes {dimension_semantics = [#tpu.dimension_semantics<parallel>], iteration_bounds = array<i64: 2>, scalar_prefetch = 0 : i64, scratch_operands = 0 : i64, tpu.core_type = #tpu.core_type<tc>, window_params = [{transform_indices = @transform_0, window_bounds = array<i64: 1, 4, 144, 64>}, {pipeline_mode = #tpu.pipeline_mode<synchronous>, transform_indices = @transform_1, window_bounds = array<i64: 32, 144>}, {pipeline_mode = #tpu.pipeline_mode<synchronous>, transform_indices = @transform_2, window_bounds = array<i64: 32, 1>}, {pipeline_mode = #tpu.pipeline_mode<synchronous>, transform_indices = @transform_3, window_bounds = array<i64: 10, 32, 64>}, {pipeline_mode = #tpu.pipeline_mode<synchronous>, transform_indices = @transform_4, window_bounds = array<i64: 10, 1>}, {transform_indices = @transform_5, window_bounds = array<i64: 1, 10, 1>}]} {
    %c0 = arith.constant 0 : index
    %c0_0 = arith.constant 0 : index
    %0 = vector.load %arg2[%c0, %c0_0] : memref<32x144xbf16, #tpu.memory_space<vmem>>, vector<32x144xbf16>
    %c0_1 = arith.constant 0 : index
    %c0_2 = arith.constant 0 : index
    %c0_3 = arith.constant 0 : index
    %c0_4 = arith.constant 0 : index
    %1 = vector.load %arg1[%c0_1, %c0_2, %c0_3, %c0_4] : memref<1x4x144x64xbf16, #tpu.memory_space<vmem>>, vector<1x1x144x64xbf16>
    %2 = vector.shape_cast %1 : vector<1x1x144x64xbf16> to vector<144x64xbf16>
    %cst = arith.constant dense<0.000000e+00> : vector<32x64xf32>
    %3 = tpu.matmul %0, %2, %cst {dimension_numbers = #tpu.dot_dimension_numbers<[1], [0], [0], [1], [0, 0, 1, 1], [], []>} : vector<32x144xbf16>, vector<144x64xbf16>, vector<32x64xf32> -> vector<32x64xf32>
    %c0_5 = arith.constant 0 : index
    %c1 = arith.constant 1 : index
    %c0_6 = arith.constant 0 : index
    %c0_7 = arith.constant 0 : index
    %4 = vector.load %arg1[%c0_5, %c1, %c0_6, %c0_7] : memref<1x4x144x64xbf16, #tpu.memory_space<vmem>>, vector<1x1x144x64xbf16>
    %5 = vector.shape_cast %4 : vector<1x1x144x64xbf16> to vector<144x64xbf16>
    %cst_8 = arith.constant dense<0.000000e+00> : vector<32x64xf32>
    %6 = tpu.matmul %0, %5, %cst_8 {dimension_numbers = #tpu.dot_dimension_numbers<[1], [0], [0], [1], [0, 0, 1, 1], [], []>} : vector<32x144xbf16>, vector<144x64xbf16>, vector<32x64xf32> -> vector<32x64xf32>
    %7 = arith.maximumf %3, %6 : vector<32x64xf32>
    %c0_9 = arith.constant 0 : index
    %c2 = arith.constant 2 : index
    %c0_10 = arith.constant 0 : index
    %c0_11 = arith.constant 0 : index
    %8 = vector.load %arg1[%c0_9, %c2, %c0_10, %c0_11] : memref<1x4x144x64xbf16, #tpu.memory_space<vmem>>, vector<1x1x144x64xbf16>
    %9 = vector.shape_cast %8 : vector<1x1x144x64xbf16> to vector<144x64xbf16>
    %cst_12 = arith.constant dense<0.000000e+00> : vector<32x64xf32>
    %10 = tpu.matmul %0, %9, %cst_12 {dimension_numbers = #tpu.dot_dimension_numbers<[1], [0], [0], [1], [0, 0, 1, 1], [], []>} : vector<32x144xbf16>, vector<144x64xbf16>, vector<32x64xf32> -> vector<32x64xf32>
    %11 = arith.maximumf %7, %10 : vector<32x64xf32>
    %c0_13 = arith.constant 0 : index
    %c3 = arith.constant 3 : index
    %c0_14 = arith.constant 0 : index
    %c0_15 = arith.constant 0 : index
    %12 = vector.load %arg1[%c0_13, %c3, %c0_14, %c0_15] : memref<1x4x144x64xbf16, #tpu.memory_space<vmem>>, vector<1x1x144x64xbf16>
    %13 = vector.shape_cast %12 : vector<1x1x144x64xbf16> to vector<144x64xbf16>
    %cst_16 = arith.constant dense<0.000000e+00> : vector<32x64xf32>
    %14 = tpu.matmul %0, %13, %cst_16 {dimension_numbers = #tpu.dot_dimension_numbers<[1], [0], [0], [1], [0, 0, 1, 1], [], []>} : vector<32x144xbf16>, vector<144x64xbf16>, vector<32x64xf32> -> vector<32x64xf32>
    %15 = arith.maximumf %11, %14 : vector<32x64xf32>
    %c0_17 = arith.constant 0 : index
    %c0_18 = arith.constant 0 : index
    %16 = vector.load %arg3[%c0_17, %c0_18] : memref<32x1xf32, #tpu.memory_space<vmem>>, vector<32x1xf32>
    %17 = vector.broadcast %16 : vector<32x1xf32> to vector<32x64xf32>
    %18 = arith.addf %15, %17 : vector<32x64xf32>
    %cst_19 = arith.constant 0.000000e+00 : f32
    %19 = vector.broadcast %cst_19 : f32 to vector<32x64xf32>
    %20 = arith.maximumf %18, %19 : vector<32x64xf32>
    %c0_20 = arith.constant 0 : index
    %c0_21 = arith.constant 0 : index
    %c0_22 = arith.constant 0 : index
    %21 = vector.load %arg4[%c0_20, %c0_21, %c0_22] : memref<10x32x64xf32, #tpu.memory_space<vmem>>, vector<10x32x64xf32>
    %22 = vector.shape_cast %20 : vector<32x64xf32> to vector<1x32x64xf32>
    %23 = vector.broadcast %22 : vector<1x32x64xf32> to vector<10x32x64xf32>
    %24 = arith.mulf %21, %23 : vector<10x32x64xf32>
    %cst_23 = arith.constant dense<0.000000e+00> : vector<10x32xf32>
    %25 = vector.multi_reduction <add>, %24, %cst_23 [2] : vector<10x32x64xf32> to vector<10x32xf32>
    %cst_24 = arith.constant dense<0.000000e+00> : vector<10xf32>
    %26 = vector.multi_reduction <add>, %25, %cst_24 [1] : vector<10x32xf32> to vector<10xf32>
    %27 = vector.shape_cast %26 : vector<10xf32> to vector<10x1xf32>
    %c0_25 = arith.constant 0 : index
    %c0_26 = arith.constant 0 : index
    %28 = vector.load %arg5[%c0_25, %c0_26] : memref<10x1xf32, #tpu.memory_space<vmem>>, vector<10x1xf32>
    %29 = arith.addf %27, %28 : vector<10x1xf32>
    %c0_27 = arith.constant 0 : index
    %c0_28 = arith.constant 0 : index
    %c0_29 = arith.constant 0 : index
    %30 = vector.load %arg6[%c0_27, %c0_28, %c0_29] : memref<1x10x1xf32, #tpu.memory_space<vmem>>, vector<1x10x1xf32>
    %31 = vector.shape_cast %30 : vector<1x10x1xf32> to vector<10x1xf32>
    %32 = vector.shape_cast %29 : vector<10x1xf32> to vector<1x10x1xf32>
    tpu.vector_store %arg6[%c0_27, %c0_28, %c0_29], %32 {strides = array<i32>} : memref<1x10x1xf32, #tpu.memory_space<vmem>>, vector<1x10x1xf32>,
    return
  }
  func.func @transform_0(%arg0: i32) -> (i32, i32, i32, i32) {
    %c0_i32 = arith.constant 0 : i32
    %c0_i32_0 = arith.constant 0 : i32
    %c0_i32_1 = arith.constant 0 : i32
    %c0_i32_2 = arith.constant 0 : i32
    return %arg0, %c0_i32, %c0_i32_0, %c0_i32_1 : i32, i32, i32, i32
  }
  func.func @transform_1(%arg0: i32) -> (i32, i32) {
    %c0_i32 = arith.constant 0 : i32
    %c0_i32_0 = arith.constant 0 : i32
    %c0_i32_1 = arith.constant 0 : i32
    return %c0_i32, %c0_i32_0 : i32, i32
  }
  func.func @transform_2(%arg0: i32) -> (i32, i32) {
    %c0_i32 = arith.constant 0 : i32
    %c0_i32_0 = arith.constant 0 : i32
    %c0_i32_1 = arith.constant 0 : i32
    return %c0_i32, %c0_i32_0 : i32, i32
  }
  func.func @transform_3(%arg0: i32) -> (i32, i32, i32) {
    %c0_i32 = arith.constant 0 : i32
    %c0_i32_0 = arith.constant 0 : i32
    %c0_i32_1 = arith.constant 0 : i32
    %c0_i32_2 = arith.constant 0 : i32
    return %c0_i32, %c0_i32_0, %c0_i32_1 : i32, i32, i32
  }
  func.func @transform_4(%arg0: i32) -> (i32, i32) {
    %c0_i32 = arith.constant 0 : i32
    %c0_i32_0 = arith.constant 0 : i32
    %c0_i32_1 = arith.constant 0 : i32
    return %c0_i32, %c0_i32_0 : i32, i32
  }
  func.func @transform_5(%arg0: i32) -> (i32, i32, i32) {
    %c0_i32 = arith.constant 0 : i32
    %c0_i32_0 = arith.constant 0 : i32
    %c0_i32_1 = arith.constant 0 : i32
    return %arg0, %c0_i32, %c0_i32_0 : i32, i32, i32
  }
}

</mosaic_0001>

<llo_original>
// kernel: simple_cnn_forward.2
$region0: #{simple_cnn_forward.2}
  #allocation0 [shape = 'u32[]', space=smem, size = 0x4, offset = 0x4, fixed_abs, tag = 'smem constant byte address 0x4 - core index']
  #allocation1 [shape = 'u32[144,128]{1,0:T(1,128)}', space=vmem, size = 0x12000, scoped, tag = 'internal scratch']
  %s0 = inlined_call_operand.vmem [shape: bf16[2,4,32,256], index: 0, kind: input, shape index: {}]
  %s1 = inlined_call_operand.vmem [shape: bf16[16,32], index: 1, kind: input, shape index: {}]
  %s2 = inlined_call_operand.vmem [shape: f32[16,1], index: 2, kind: input, shape index: {}]
  %s3 = inlined_call_operand.vmem [shape: bf16[2,16,256], index: 3, kind: output, shape index: {}]
  %s4 = sld [smem:[#allocation0]]
  $region45: #{simple_cnn_forward.2} parent=0
    _
  %s6 = ssub.s32 1, %s4
  %s7 = scalar_select 0, %s6, %s4
  loop: start=0, step=1, limit=4
  $region2: #{simple_cnn_forward.2} parent=0 // loop_pre_header
    _
  $region3: #{simple_cnn_forward.2} parent=0 // loop_header
    %s9 = sphi 0, %s13
    %p10 = scmp.ge.s32.totalorder %s9, 4
    %s19 = sphi 0, %s21
    %s22 = sphi 0, %s19
    %s23 = sphi 0, %s22
    %s39 = sphi 0, %s23
    %s43 = sphi 0, %s43
    %s45 = sphi 0, %s43
    %s46 = sphi 0, %s45
    %s60 = sphi 0, %s46
    %s64 = sphi 0, %s64
    %s66 = sphi 0, %s64
    %s67 = sphi 0, %s66
    %s81 = sphi 0, %s67
    %s87 = sphi 0, %s89
    %s90 = sphi 0, %s87
    %s91 = sphi 0, %s90
    %s107 = sphi 0, %s91
  $region4: #{simple_cnn_forward.2} parent=0 // loop_header_branch
    %12 = sbr.rel (%p10) target = $region8
  $region5: #{simple_cnn_forward.2} parent=0 // loop_body
    %s14 = ssub.s32 %s9, 1
    %s15 = ssub.s32 %s9, 2
    %s16 = sadd.s32 %s9, 1
    %s17 = ssub.s32 %s9, %s16
    %p18 = scmp.eq.s32.totalorder %s17, 0
    %s20 = sadd.s32 %s19, 1
    %s21 = scalar_select %p18, %s19, %s20
    %p24 = pneg %p18
    %p25 = scmp.eq.s32.totalorder %s9, 1
    %p26 = por %p24, %p25
    %p27 = scmp.ne.s32.totalorder %s19, %s22
    %p28 = scmp.eq.s32.totalorder %s9, 0
    %p29 = por %p27, %p28
    %p30 = scmp.ne.s32.totalorder %s19, %s22
    %p31 = scmp.eq.s32.totalorder %s14, 1
    %p32 = por %p30, %p31
    %p33 = scmp.ne.s32.totalorder %s22, %s23
    %p34 = scmp.eq.s32.totalorder %s14, 0
    %p35 = por %p33, %p34
    %p36 = scmp.ne.s32.totalorder %s22, %s23
    %p37 = scmp.eq.s32.totalorder %s15, 1
    %p38 = por %p36, %p37
    %p40 = scmp.ne.s32.totalorder %s23, %s39
    %p41 = scmp.eq.s32.totalorder %s15, 0
    %p42 = por %p40, %p41
    %s44 = sadd.s32 %s43, 1
    %p47 = scmp.eq.s32.totalorder %s9, 1
    %p48 = scmp.ne.s32.totalorder %s43, %s45
    %p49 = scmp.eq.s32.totalorder %s9, 0
    %p50 = por %p48, %p49
    %p51 = scmp.ne.s32.totalorder %s43, %s45
    %p52 = scmp.eq.s32.totalorder %s14, 1
    %p53 = por %p51, %p52
    %p54 = scmp.ne.s32.totalorder %s45, %s46
    %p55 = scmp.eq.s32.totalorder %s14, 0
    %p56 = por %p54, %p55
    %p57 = scmp.ne.s32.totalorder %s45, %s46
    %p58 = scmp.eq.s32.totalorder %s15, 1
    %p59 = por %p57, %p58
    %p61 = scmp.ne.s32.totalorder %s46, %s60
    %p62 = scmp.eq.s32.totalorder %s15, 0
    %p63 = por %p61, %p62
    %s65 = sadd.s32 %s64, 1
    %p68 = scmp.eq.s32.totalorder %s9, 1
    %p69 = scmp.ne.s32.totalorder %s64, %s66
    %p70 = scmp.eq.s32.totalorder %s9, 0
    %p71 = por %p69, %p70
    %p72 = scmp.ne.s32.totalorder %s64, %s66
    %p73 = scmp.eq.s32.totalorder %s14, 1
    %p74 = por %p72, %p73
    %p75 = scmp.ne.s32.totalorder %s66, %s67
    %p76 = scmp.eq.s32.totalorder %s14, 0
    %p77 = por %p75, %p76
    %p78 = scmp.ne.s32.totalorder %s66, %s67
    %p79 = scmp.eq.s32.totalorder %s15, 1
    %p80 = por %p78, %p79
    %p82 = scmp.ne.s32.totalorder %s67, %s81
    %p83 = scmp.eq.s32.totalorder %s15, 0
    %p84 = por %p82, %p83
    %s85 = ssub.s32 %s9, %s16
    %p86 = scmp.eq.s32.totalorder %s85, 0
    %s88 = sadd.s32 %s87, 1
    %s89 = scalar_select %p86, %s87, %s88
    %p92 = pneg %p86
    %p93 = scmp.eq.s32.totalorder %s9, 1
    %p94 = por %p92, %p93
    %p95 = scmp.ne.s32.totalorder %s87, %s90
    %p96 = scmp.eq.s32.totalorder %s9, 0
    %p97 = por %p95, %p96
    %p98 = scmp.ne.s32.totalorder %s87, %s90
    %p99 = scmp.eq.s32.totalorder %s14, 1
    %p100 = por %p98, %p99
    %p101 = scmp.ne.s32.totalorder %s90, %s91
    %p102 = scmp.eq.s32.totalorder %s14, 0
    %p103 = por %p101, %p102
    %p104 = scmp.ne.s32.totalorder %s90, %s91
    %p105 = scmp.eq.s32.totalorder %s15, 1
    %p106 = por %p104, %p105
    %p108 = scmp.ne.s32.totalorder %s91, %s107
    %p109 = scmp.eq.s32.totalorder %s15, 0
    %p110 = por %p108, %p109
    %p111 = scmp.le.s32.totalorder 1, %s9
    %p112 = scmp.lt.s32.totalorder %s9, 3
    %p113 = pnand %p111, %p112
    %p114 = pneg %p113
    // Predicated region
    $region9: #{simple_cnn_forward.2} parent=5 // pred_check
      _
    $region10: #{simple_cnn_forward.2} parent=5 // pred_check_branch
      %116 = sbr.rel (%p113) target = $region12
    $region11: #{simple_cnn_forward.2} parent=5 // pred_region
      %s117 = ssub.s32 %s9, 1
      // Predicated region
      $region13: #{simple_cnn_forward.2} parent=11 // pred_check
        %p118 = pneg %p56
      $region14: #{simple_cnn_forward.2} parent=11 // pred_check_branch
        %120 = sbr.rel (%p118) target = $region16
      $region15: #{simple_cnn_forward.2} parent=11 // pred_region
        _
      $region16: #{simple_cnn_forward.2} parent=11 // pred_fallthru
        _
      // Predicated region
      $region17: #{simple_cnn_forward.2} parent=11 // pred_check
        %p121 = pneg %p77
      $region18: #{simple_cnn_forward.2} parent=11 // pred_check_branch
        %123 = sbr.rel (%p121) target = $region20
      $region19: #{simple_cnn_forward.2} parent=11 // pred_region
        _
      $region20: #{simple_cnn_forward.2} parent=11 // pred_fallthru
        _
    $region12: #{simple_cnn_forward.2} parent=5 // pred_fallthru
      _
    %p124 = scmp.lt.s32.totalorder %s9, 2
    // Predicated region
    $region21: #{simple_cnn_forward.2} parent=5 // pred_check
      %p125 = pneg %p124
    $region22: #{simple_cnn_forward.2} parent=5 // pred_check_branch
      %127 = sbr.rel (%p125) target = $region24
    $region23: #{simple_cnn_forward.2} parent=5 // pred_region
      // Predicated region
      $region25: #{simple_cnn_forward.2} parent=23 // pred_check
        %p128 = pneg %p29
      $region26: #{simple_cnn_forward.2} parent=23 // pred_check_branch
        %130 = sbr.rel (%p128) target = $region28
      $region27: #{simple_cnn_forward.2} parent=23 // pred_region
        %p131 = scmp.lt.s32.totalorder %s9, 1
        %s132 = scalar_select %p131, %s9, 1
        %s133 = smul.addr %s132, 32
        %s134 = smul.addr %s133, 4
        %s135 = scalar_lea.vmem %s0, %s134
      $region28: #{simple_cnn_forward.2} parent=23 // pred_fallthru
        _
    $region24: #{simple_cnn_forward.2} parent=5 // pred_fallthru
      _
    %p136 = scmp.le.s32.totalorder 1, %s9
    %p137 = scmp.lt.s32.totalorder %s9, 3
    %p138 = pnand %p136, %p137
    %p139 = pneg %p138
    // Predicated region
    $region29: #{simple_cnn_forward.2} parent=5 // pred_check
      _
    $region30: #{simple_cnn_forward.2} parent=5 // pred_check_branch
      %141 = sbr.rel (%p138) target = $region32
    $region31: #{simple_cnn_forward.2} parent=5 // pred_region
      %s142 = ssub.s32 %s9, 1
      %p143 = scmp.lt.s32.totalorder %s14, 1
      %s144 = scalar_select %p143, %s14, 1
      %s145 = smul.addr %s144, 32
      %s146 = smul.addr %s145, 4
      %s147 = scalar_lea.vmem %s0, %s146
      %p148 = pneg %p35
      %p149 = pneg %p32
      %p150 = pneg %p56
      %p151 = pneg %p53
      %p152 = pneg %p77
      %p153 = pneg %p74
      %p154 = pneg %p103
      %p155 = pneg %p100
      %p156 = scmp.lt.s32.totalorder %s14, 1
      %s157 = scalar_select %p156, %s14, 1
      %s158 = smul.addr %s157, 4
      %s159 = smul.addr %s158, 4
      %s160 = scalar_lea.vmem %s3, %s159
      %p161 = scmp.lt.s32.totalorder %s14, 1
      %s162 = scalar_select %p161, %s14, 1
      %s163 = smul.addr %s162, 32
      %s164 = smul.addr %s163, 4
      %s165 = scalar_lea.vmem %s0, %s164
      %p166 = scmp.lt.s32.totalorder %s14, 1
      %s167 = scalar_select %p166, %s14, 1
      %s168 = smul.addr %s167, 4
      %s169 = smul.addr %s168, 4
      %s170 = scalar_lea.vmem %s3, %s169
      %v172 = vld [vmem:[%s1] sm:$0xf]
      %v173 = vld [vmem:[%s1 + $0x4] sm:$0xf]
      %v174 = vld [vmem:[%s165] sm:$0xff]
      %v175 = vld [vmem:[%s165 + $0x8] sm:$0xff]
      %v176 = vld [vmem:[%s165 + $0x10] sm:$0xff]
      %v177 = vld [vmem:[%s165 + $0x18] sm:$0xff]
      %v180 = vunpack.c.l.b16 %v172
      %v181 = vunpack.c.l.b16 %v173
      %v182 = vpack.c.b16 %v181, %v180
      %v187 = vunpack.c.l.b16 %v174
      %v188 = vunpack.c.h.b16 %v174
      %v189 = vunpack.c.l.b16 %v175
      %v190 = vunpack.c.h.b16 %v175
      %v191 = vunpack.c.l.b16 %v176
      %v192 = vunpack.c.h.b16 %v176
      %v193 = vunpack.c.l.b16 %v177
      %v194 = vunpack.c.h.b16 %v177
      %v195 = vpack.c.b16 %v189, %v187
      %v196 = vpack.c.b16 %v190, %v188
      %v197 = vpack.c.b16 %v193, %v191
      %v198 = vpack.c.b16 %v194, %v192
      %vm203 = vcmask 261120
      %v205 = vsel %vm203, %v182, 0
      %207 = vmatprep.subr.bf16.mxu0 %v196
      %208 = vmatpush1.bf16.msra.mxu0 %v195
      %209 = vmatprep.subr.bf16.mxu0 %v198
      %210 = vmatpush1.bf16.msra.mxu0 %v197
      %211 = vmatprep.subr.bf16.mxu0 0
      %212 = vmatpush1.bf16.msra.mxu0 0
      %213 = vmatprep.subr.bf16.mxu0 0
      %214 = vmatpush1.bf16.msra.mxu0 0
      %215 = vmatprep.subr.bf16.mxu0 0
      %216 = vmatpush1.bf16.msra.mxu0 0
      %217 = vmatprep.subr.bf16.mxu0 0
      %218 = vmatpush1.bf16.msra.mxu0 0
      %219 = vmatprep.subr.bf16.mxu0 0
      %220 = vmatpush1.bf16.msra.mxu0 0
      %221 = vmatprep.subr.bf16.mxu0 0
      %222 = vmatpush1.bf16.msra.mxu0 0
      %223 = vmatprep.subr.bf16.mxu0 0
      %224 = vmatpush1.bf16.msra.mxu0 0
      %225 = vmatprep.subr.bf16.mxu0 0
      %226 = vmatpush1.bf16.msra.mxu0 0
      %227 = vmatprep.subr.bf16.mxu0 0
      %228 = vmatpush1.bf16.msra.mxu0 0
      %229 = vmatprep.subr.bf16.mxu0 0
      %230 = vmatpush1.bf16.msra.mxu0 0
      %231 = vmatprep.subr.bf16.mxu0 0
      %232 = vmatpush1.bf16.msra.mxu0 0
      %233 = vmatprep.subr.bf16.mxu0 0
      %234 = vmatpush1.bf16.msra.mxu0 0
      %235 = vmatprep.subr.bf16.mxu0 0
      %236 = vmatpush1.bf16.msra.mxu0 0
      %237 = vmatprep.subr.bf16.mxu0 0
      %238 = vmatpush1.bf16.msra.mxu0 0
      %239 = vmatprep.mubr.bf16.mxu0 0
      %240 = vmatmul.mubr.bf16.gmra.mrb[0].mxu0 %v205
      %v241 = vpop.f32.mrb[0].mxu0
      %v242 = vadd.f32 0.0, %v241
      %v243 = vpop.f32.mrb[0].mxu0
      %v244 = vadd.f32 0.0, %v243
      %v245 = vpop.f32.mrb[0].mxu0
      %v246 = vadd.f32 0.0, %v245
      %v247 = vpop.f32.mrb[0].mxu0
      %v248 = vadd.f32 0.0, %v247
      %249 = vdwg.mxu0
      %s250 = scalar_lea.vmem %s165, 32
      %v251 = vld [vmem:[%s250] sm:$0xff]
      %v252 = vld [vmem:[%s250 + $0x8] sm:$0xff]
      %v253 = vld [vmem:[%s250 + $0x10] sm:$0xff]
      %v254 = vld [vmem:[%s250 + $0x18] sm:$0xff]
      %v259 = vunpack.c.l.b16 %v251
      %v260 = vunpack.c.h.b16 %v251
      %v261 = vunpack.c.l.b16 %v252
      %v262 = vunpack.c.h.b16 %v252
      %v263 = vunpack.c.l.b16 %v253
      %v264 = vunpack.c.h.b16 %v253
      %v265 = vunpack.c.l.b16 %v254
      %v266 = vunpack.c.h.b16 %v254
      %v267 = vpack.c.b16 %v261, %v259
      %v268 = vpack.c.b16 %v262, %v260
      %v269 = vpack.c.b16 %v265, %v263
      %v270 = vpack.c.b16 %v266, %v264
      %275 = vmatprep.subr.bf16.mxu0 %v268
      %276 = vmatpush1.bf16.msra.mxu0 %v267
      %277 = vmatprep.subr.bf16.mxu0 %v270
      %278 = vmatpush1.bf16.msra.mxu0 %v269
      %279 = vmatprep.subr.bf16.mxu0 0
      %280 = vmatpush1.bf16.msra.mxu0 0
      %281 = vmatprep.subr.bf16.mxu0 0
      %282 = vmatpush1.bf16.msra.mxu0 0
      %283 = vmatprep.subr.bf16.mxu0 0
      %284 = vmatpush1.bf16.msra.mxu0 0
      %285 = vmatprep.subr.bf16.mxu0 0
      %286 = vmatpush1.bf16.msra.mxu0 0
      %287 = vmatprep.subr.bf16.mxu0 0
      %288 = vmatpush1.bf16.msra.mxu0 0
      %289 = vmatprep.subr.bf16.mxu0 0
      %290 = vmatpush1.bf16.msra.mxu0 0
      %291 = vmatprep.subr.bf16.mxu0 0
      %292 = vmatpush1.bf16.msra.mxu0 0
      %293 = vmatprep.subr.bf16.mxu0 0
      %294 = vmatpush1.bf16.msra.mxu0 0
      %295 = vmatprep.subr.bf16.mxu0 0
      %296 = vmatpush1.bf16.msra.mxu0 0
      %297 = vmatprep.subr.bf16.mxu0 0
      %298 = vmatpush1.bf16.msra.mxu0 0
      %299 = vmatprep.subr.bf16.mxu0 0
      %300 = vmatpush1.bf16.msra.mxu0 0
      %301 = vmatprep.subr.bf16.mxu0 0
      %302 = vmatpush1.bf16.msra.mxu0 0
      %303 = vmatprep.subr.bf16.mxu0 0
      %304 = vmatpush1.bf16.msra.mxu0 0
      %305 = vmatprep.subr.bf16.mxu0 0
      %306 = vmatpush1.bf16.msra.mxu0 0
      %307 = vmatprep.mubr.bf16.mxu0 0
      %308 = vmatmul.mubr.bf16.gmra.mrb[0].mxu0 %v205
      %v309 = vpop.f32.mrb[0].mxu0
      %v310 = vadd.f32 0.0, %v309
      %v311 = vpop.f32.mrb[0].mxu0
      %v312 = vadd.f32 0.0, %v311
      %v313 = vpop.f32.mrb[0].mxu0
      %v314 = vadd.f32 0.0, %v313
      %v315 = vpop.f32.mrb[0].mxu0
      %v316 = vadd.f32 0.0, %v315
      %317 = vdwg.mxu0
      %v318 = vmax.f32 %v242, %v310
      %v319 = vmax.f32 %v244, %v312
      %v320 = vmax.f32 %v246, %v314
      %v321 = vmax.f32 %v248, %v316
      %s322 = scalar_lea.vmem %s165, 64
      %v323 = vld [vmem:[%s322] sm:$0xff]
      %v324 = vld [vmem:[%s322 + $0x8] sm:$0xff]
      %v325 = vld [vmem:[%s322 + $0x10] sm:$0xff]
      %v326 = vld [vmem:[%s322 + $0x18] sm:$0xff]
      %v331 = vunpack.c.l.b16 %v323
      %v332 = vunpack.c.h.b16 %v323
      %v333 = vunpack.c.l.b16 %v324
      %v334 = vunpack.c.h.b16 %v324
      %v335 = vunpack.c.l.b16 %v325
      %v336 = vunpack.c.h.b16 %v325
      %v337 = vunpack.c.l.b16 %v326
      %v338 = vunpack.c.h.b16 %v326
      %v339 = vpack.c.b16 %v333, %v331
      %v340 = vpack.c.b16 %v334, %v332
      %v341 = vpack.c.b16 %v337, %v335
      %v342 = vpack.c.b16 %v338, %v336
      %347 = vmatprep.subr.bf16.mxu0 %v340
      %348 = vmatpush1.bf16.msra.mxu0 %v339
      %349 = vmatprep.subr.bf16.mxu0 %v342
      %350 = vmatpush1.bf16.msra.mxu0 %v341
      %351 = vmatprep.subr.bf16.mxu0 0
      %352 = vmatpush1.bf16.msra.mxu0 0
      %353 = vmatprep.subr.bf16.mxu0 0
      %354 = vmatpush1.bf16.msra.mxu0 0
      %355 = vmatprep.subr.bf16.mxu0 0
      %356 = vmatpush1.bf16.msra.mxu0 0
      %357 = vmatprep.subr.bf16.mxu0 0
      %358 = vmatpush1.bf16.msra.mxu0 0
      %359 = vmatprep.subr.bf16.mxu0 0
      %360 = vmatpush1.bf16.msra.mxu0 0
      %361 = vmatprep.subr.bf16.mxu0 0
      %362 = vmatpush1.bf16.msra.mxu0 0
      %363 = vmatprep.subr.bf16.mxu0 0
      %364 = vmatpush1.bf16.msra.mxu0 0
      %365 = vmatprep.subr.bf16.mxu0 0
      %366 = vmatpush1.bf16.msra.mxu0 0
      %367 = vmatprep.subr.bf16.mxu0 0
      %368 = vmatpush1.bf16.msra.mxu0 0
      %369 = vmatprep.subr.bf16.mxu0 0
      %370 = vmatpush1.bf16.msra.mxu0 0
      %371 = vmatprep.subr.bf16.mxu0 0
      %372 = vmatpush1.bf16.msra.mxu0 0
      %373 = vmatprep.subr.bf16.mxu0 0
      %374 = vmatpush1.bf16.msra.mxu0 0
      %375 = vmatprep.subr.bf16.mxu0 0
      %376 = vmatpush1.bf16.msra.mxu0 0
      %377 = vmatprep.subr.bf16.mxu0 0
      %378 = vmatpush1.bf16.msra.mxu0 0
      %379 = vmatprep.mubr.bf16.mxu0 0
      %380 = vmatmul.mubr.bf16.gmra.mrb[0].mxu0 %v205
      %v381 = vpop.f32.mrb[0].mxu0
      %v382 = vadd.f32 0.0, %v381
      %v383 = vpop.f32.mrb[0].mxu0
      %v384 = vadd.f32 0.0, %v383
      %v385 = vpop.f32.mrb[0].mxu0
      %v386 = vadd.f32 0.0, %v385
      %v387 = vpop.f32.mrb[0].mxu0
      %v388 = vadd.f32 0.0, %v387
      %389 = vdwg.mxu0
      %v390 = vmax.f32 %v318, %v382
      %v391 = vmax.f32 %v319, %v384
      %v392 = vmax.f32 %v320, %v386
      %v393 = vmax.f32 %v321, %v388
      %s394 = scalar_lea.vmem %s165, 96
      %v395 = vld [vmem:[%s394] sm:$0xff]
      %v396 = vld [vmem:[%s394 + $0x8] sm:$0xff]
      %v397 = vld [vmem:[%s394 + $0x10] sm:$0xff]
      %v398 = vld [vmem:[%s394 + $0x18] sm:$0xff]
      %v403 = vunpack.c.l.b16 %v395
      %v404 = vunpack.c.h.b16 %v395
      %v405 = vunpack.c.l.b16 %v396
      %v406 = vunpack.c.h.b16 %v396
      %v407 = vunpack.c.l.b16 %v397
      %v408 = vunpack.c.h.b16 %v397
      %v409 = vunpack.c.l.b16 %v398
      %v410 = vunpack.c.h.b16 %v398
      %v411 = vpack.c.b16 %v405, %v403
      %v412 = vpack.c.b16 %v406, %v404
      %v413 = vpack.c.b16 %v409, %v407
      %v414 = vpack.c.b16 %v410, %v408
      %419 = vmatprep.subr.bf16.mxu0 %v412
      %420 = vmatpush1.bf16.msra.mxu0 %v411
      %421 = vmatprep.subr.bf16.mxu0 %v414
      %422 = vmatpush1.bf16.msra.mxu0 %v413
      %423 = vmatprep.subr.bf16.mxu0 0
      %424 = vmatpush1.bf16.msra.mxu0 0
      %425 = vmatprep.subr.bf16.mxu0 0
      %426 = vmatpush1.bf16.msra.mxu0 0
      %427 = vmatprep.subr.bf16.mxu0 0
      %428 = vmatpush1.bf16.msra.mxu0 0
      %429 = vmatprep.subr.bf16.mxu0 0
      %430 = vmatpush1.bf16.msra.mxu0 0
      %431 = vmatprep.subr.bf16.mxu0 0
      %432 = vmatpush1.bf16.msra.mxu0 0
      %433 = vmatprep.subr.bf16.mxu0 0
      %434 = vmatpush1.bf16.msra.mxu0 0
      %435 = vmatprep.subr.bf16.mxu0 0
      %436 = vmatpush1.bf16.msra.mxu0 0
      %437 = vmatprep.subr.bf16.mxu0 0
      %438 = vmatpush1.bf16.msra.mxu0 0
      %439 = vmatprep.subr.bf16.mxu0 0
      %440 = vmatpush1.bf16.msra.mxu0 0
      %441 = vmatprep.subr.bf16.mxu0 0
      %442 = vmatpush1.bf16.msra.mxu0 0
      %443 = vmatprep.subr.bf16.mxu0 0
      %444 = vmatpush1.bf16.msra.mxu0 0
      %445 = vmatprep.subr.bf16.mxu0 0
      %446 = vmatpush1.bf16.msra.mxu0 0
      %447 = vmatprep.subr.bf16.mxu0 0
      %448 = vmatpush1.bf16.msra.mxu0 0
      %449 = vmatprep.subr.bf16.mxu0 0
      %450 = vmatpush1.bf16.msra.mxu0 0
      %451 = vmatprep.mubr.bf16.mxu0 0
      %452 = vmatmul.mubr.bf16.gmra.mrb[0].mxu0 %v205
      %v453 = vpop.f32.mrb[0].mxu0
      %v454 = vadd.f32 0.0, %v453
      %v455 = vpop.f32.mrb[0].mxu0
      %v456 = vadd.f32 0.0, %v455
      %v457 = vpop.f32.mrb[0].mxu0
      %v458 = vadd.f32 0.0, %v457
      %v459 = vpop.f32.mrb[0].mxu0
      %v460 = vadd.f32 0.0, %v459
      %461 = vdwg.mxu0
      %v462 = vmax.f32 %v390, %v454
      %v463 = vmax.f32 %v391, %v456
      %v464 = vmax.f32 %v392, %v458
      %v465 = vmax.f32 %v393, %v460
      %v466 = vld [vmem:[%s2] sm:$0xff]
      %v467 = vld [vmem:[%s2 + $0x8] sm:$0xff]
      %469 = vset.pattern.permute.xlu0 0
      %470 = vperm.xlu0 %469, %v466
      %v471 = vpop.permute.xlu0 %470
      %474 = vset.pattern.permute.xlu0 0
      %475 = vperm.xlu0 %474, %v467
      %v476 = vpop.permute.xlu0 %475
      %v478 = vadd.f32 %v462, %v471
      %v479 = vadd.f32 %v463, %v471
      %v480 = vadd.f32 %v464, %v476
      %v481 = vadd.f32 %v465, %v476
      %v482 = vmax.f32 %v478, 0.0
      %v483 = vmax.f32 %v479, 0.0
      %v484 = vmax.f32 %v480, 0.0
      %v485 = vmax.f32 %v481, 0.0
      %v486 = vpack.c.bf16 %v484, %v482
      %v487 = vpack.c.bf16 %v485, %v483
      %v490 = vunpack.c.l.b16 %v486
      %v491 = vunpack.c.l.b16 %v487
      %v492 = vunpack.c.h.b16 %v486
      %v493 = vunpack.c.h.b16 %v487
      %v494 = vpack.c.b16 %v491, %v490
      %v495 = vpack.c.b16 %v493, %v492
      %498 = vst [vmem:[%s170] sm:$0xff] %v494
      %499 = vst [vmem:[%s170 + $0x8] sm:$0xff] %v495
      %p500 = scmp.lt.s32.totalorder %s14, 1
      %s501 = scalar_select %p500, %s14, 1
      %s502 = smul.addr %s501, 4
      %s503 = smul.addr %s502, 4
      %s504 = scalar_lea.vmem %s3, %s503
      // Predicated region
      $region33: #{simple_cnn_forward.2} parent=31 // pred_check
        %p505 = pneg %p100
      $region34: #{simple_cnn_forward.2} parent=31 // pred_check_branch
        %507 = sbr.rel (%p505) target = $region36
      $region35: #{simple_cnn_forward.2} parent=31 // pred_region
        _
      $region36: #{simple_cnn_forward.2} parent=31 // pred_fallthru
        _
    $region32: #{simple_cnn_forward.2} parent=5 // pred_fallthru
      _
    %p508 = scmp.le.s32.totalorder 2, %s9
    // Predicated region
    $region37: #{simple_cnn_forward.2} parent=5 // pred_check
      %p509 = pneg %p508
    $region38: #{simple_cnn_forward.2} parent=5 // pred_check_branch
      %511 = sbr.rel (%p509) target = $region40
    $region39: #{simple_cnn_forward.2} parent=5 // pred_region
      %s512 = ssub.s32 %s9, 2
      // Predicated region
      $region41: #{simple_cnn_forward.2} parent=39 // pred_check
        %p513 = pneg %p106
      $region42: #{simple_cnn_forward.2} parent=39 // pred_check_branch
        %515 = sbr.rel (%p513) target = $region44
      $region43: #{simple_cnn_forward.2} parent=39 // pred_region
        %p516 = scmp.lt.s32.totalorder %s15, 1
        %s517 = scalar_select %p516, %s15, 1
        %s518 = smul.addr %s517, 4
        %s519 = smul.addr %s518, 4
        %s520 = scalar_lea.vmem %s3, %s519
      $region44: #{simple_cnn_forward.2} parent=39 // pred_fallthru
        _
    $region40: #{simple_cnn_forward.2} parent=5 // pred_fallthru
      _
  $region6: #{simple_cnn_forward.2} parent=0 // loop_footer
    %s13 = sadd.s32 1, %s9
  $region7: #{simple_cnn_forward.2} parent=0 // loop_footer_branch
    %8 = sbr.rel target = $region3
  $region8: #{simple_cnn_forward.2} parent=0 // loop_exit
    _

// kernel: simple_cnn_forward.3
$region0: #{simple_cnn_forward.3}
  #allocation0 [shape = 'u32[]', space=smem, size = 0x4, offset = 0x4, fixed_abs, tag = 'smem constant byte address 0x4 - core index']
  #allocation1 [shape = 'u32[144,128]{1,0:T(1,128)}', space=vmem, size = 0x12000, scoped, tag = 'internal scratch']
  %s0 = inlined_call_operand.vmem [shape: bf16[2,4,144,64], index: 0, kind: input, shape index: {}]
  %s1 = inlined_call_operand.vmem [shape: bf16[32,144], index: 1, kind: input, shape index: {}]
  %s2 = inlined_call_operand.vmem [shape: f32[32,1], index: 2, kind: input, shape index: {}]
  %s3 = inlined_call_operand.vmem [shape: f32[10,32,64], index: 3, kind: input, shape index: {}]
  %s4 = inlined_call_operand.vmem [shape: f32[10,1], index: 4, kind: input, shape index: {}]
  %s5 = inlined_call_operand.vmem [shape: f32[2,10,1], index: 5, kind: output, shape index: {}]
  %s6 = sld [smem:[#allocation0]]
  $region53: #{simple_cnn_forward.3} parent=0
    _
  %s8 = ssub.s32 1, %s6
  %s9 = scalar_select 0, %s8, %s6
  loop: start=0, step=1, limit=4
  $region2: #{simple_cnn_forward.3} parent=0 // loop_pre_header
    _
  $region3: #{simple_cnn_forward.3} parent=0 // loop_header
    %s11 = sphi 0, %s15
    %p12 = scmp.ge.s32.totalorder %s11, 4
    %s21 = sphi 0, %s23
    %s24 = sphi 0, %s21
    %s25 = sphi 0, %s24
    %s41 = sphi 0, %s25
    %s45 = sphi 0, %s45
    %s47 = sphi 0, %s45
    %s48 = sphi 0, %s47
    %s62 = sphi 0, %s48
    %s66 = sphi 0, %s66
    %s68 = sphi 0, %s66
    %s69 = sphi 0, %s68
    %s83 = sphi 0, %s69
    %s87 = sphi 0, %s87
    %s89 = sphi 0, %s87
    %s90 = sphi 0, %s89
    %s104 = sphi 0, %s90
    %s108 = sphi 0, %s108
    %s110 = sphi 0, %s108
    %s111 = sphi 0, %s110
    %s125 = sphi 0, %s111
    %s131 = sphi 0, %s133
    %s134 = sphi 0, %s131
    %s135 = sphi 0, %s134
    %s151 = sphi 0, %s135
  $region4: #{simple_cnn_forward.3} parent=0 // loop_header_branch
    %14 = sbr.rel (%p12) target = $region8
  $region5: #{simple_cnn_forward.3} parent=0 // loop_body
    %s16 = ssub.s32 %s11, 1
    %s17 = ssub.s32 %s11, 2
    %s18 = sadd.s32 %s11, 1
    %s19 = ssub.s32 %s11, %s18
    %p20 = scmp.eq.s32.totalorder %s19, 0
    %s22 = sadd.s32 %s21, 1
    %s23 = scalar_select %p20, %s21, %s22
    %p26 = pneg %p20
    %p27 = scmp.eq.s32.totalorder %s11, 1
    %p28 = por %p26, %p27
    %p29 = scmp.ne.s32.totalorder %s21, %s24
    %p30 = scmp.eq.s32.totalorder %s11, 0
    %p31 = por %p29, %p30
    %p32 = scmp.ne.s32.totalorder %s21, %s24
    %p33 = scmp.eq.s32.totalorder %s16, 1
    %p34 = por %p32, %p33
    %p35 = scmp.ne.s32.totalorder %s24, %s25
    %p36 = scmp.eq.s32.totalorder %s16, 0
    %p37 = por %p35, %p36
    %p38 = scmp.ne.s32.totalorder %s24, %s25
    %p39 = scmp.eq.s32.totalorder %s17, 1
    %p40 = por %p38, %p39
    %p42 = scmp.ne.s32.totalorder %s25, %s41
    %p43 = scmp.eq.s32.totalorder %s17, 0
    %p44 = por %p42, %p43
    %s46 = sadd.s32 %s45, 1
    %p49 = scmp.eq.s32.totalorder %s11, 1
    %p50 = scmp.ne.s32.totalorder %s45, %s47
    %p51 = scmp.eq.s32.totalorder %s11, 0
    %p52 = por %p50, %p51
    %p53 = scmp.ne.s32.totalorder %s45, %s47
    %p54 = scmp.eq.s32.totalorder %s16, 1
    %p55 = por %p53, %p54
    %p56 = scmp.ne.s32.totalorder %s47, %s48
    %p57 = scmp.eq.s32.totalorder %s16, 0
    %p58 = por %p56, %p57
    %p59 = scmp.ne.s32.totalorder %s47, %s48
    %p60 = scmp.eq.s32.totalorder %s17, 1
    %p61 = por %p59, %p60
    %p63 = scmp.ne.s32.totalorder %s48, %s62
    %p64 = scmp.eq.s32.totalorder %s17, 0
    %p65 = por %p63, %p64
    %s67 = sadd.s32 %s66, 1
    %p70 = scmp.eq.s32.totalorder %s11, 1
    %p71 = scmp.ne.s32.totalorder %s66, %s68
    %p72 = scmp.eq.s32.totalorder %s11, 0
    %p73 = por %p71, %p72
    %p74 = scmp.ne.s32.totalorder %s66, %s68
    %p75 = scmp.eq.s32.totalorder %s16, 1
    %p76 = por %p74, %p75
    %p77 = scmp.ne.s32.totalorder %s68, %s69
    %p78 = scmp.eq.s32.totalorder %s16, 0
    %p79 = por %p77, %p78
    %p80 = scmp.ne.s32.totalorder %s68, %s69
    %p81 = scmp.eq.s32.totalorder %s17, 1
    %p82 = por %p80, %p81
    %p84 = scmp.ne.s32.totalorder %s69, %s83
    %p85 = scmp.eq.s32.totalorder %s17, 0
    %p86 = por %p84, %p85
    %s88 = sadd.s32 %s87, 1
    %p91 = scmp.eq.s32.totalorder %s11, 1
    %p92 = scmp.ne.s32.totalorder %s87, %s89
    %p93 = scmp.eq.s32.totalorder %s11, 0
    %p94 = por %p92, %p93
    %p95 = scmp.ne.s32.totalorder %s87, %s89
    %p96 = scmp.eq.s32.totalorder %s16, 1
    %p97 = por %p95, %p96
    %p98 = scmp.ne.s32.totalorder %s89, %s90
    %p99 = scmp.eq.s32.totalorder %s16, 0
    %p100 = por %p98, %p99
    %p101 = scmp.ne.s32.totalorder %s89, %s90
    %p102 = scmp.eq.s32.totalorder %s17, 1
    %p103 = por %p101, %p102
    %p105 = scmp.ne.s32.totalorder %s90, %s104
    %p106 = scmp.eq.s32.totalorder %s17, 0
    %p107 = por %p105, %p106
    %s109 = sadd.s32 %s108, 1
    %p112 = scmp.eq.s32.totalorder %s11, 1
    %p113 = scmp.ne.s32.totalorder %s108, %s110
    %p114 = scmp.eq.s32.totalorder %s11, 0
    %p115 = por %p113, %p114
    %p116 = scmp.ne.s32.totalorder %s108, %s110
    %p117 = scmp.eq.s32.totalorder %s16, 1
    %p118 = por %p116, %p117
    %p119 = scmp.ne.s32.totalorder %s110, %s111
    %p120 = scmp.eq.s32.totalorder %s16, 0
    %p121 = por %p119, %p120
    %p122 = scmp.ne.s32.totalorder %s110, %s111
    %p123 = scmp.eq.s32.totalorder %s17, 1
    %p124 = por %p122, %p123
    %p126 = scmp.ne.s32.totalorder %s111, %s125
    %p127 = scmp.eq.s32.totalorder %s17, 0
    %p128 = por %p126, %p127
    %s129 = ssub.s32 %s11, %s18
    %p130 = scmp.eq.s32.totalorder %s129, 0
    %s132 = sadd.s32 %s131, 1
    %s133 = scalar_select %p130, %s131, %s132
    %p136 = pneg %p130
    %p137 = scmp.eq.s32.totalorder %s11, 1
    %p138 = por %p136, %p137
    %p139 = scmp.ne.s32.totalorder %s131, %s134
    %p140 = scmp.eq.s32.totalorder %s11, 0
    %p141 = por %p139, %p140
    %p142 = scmp.ne.s32.totalorder %s131, %s134
    %p143 = scmp.eq.s32.totalorder %s16, 1
    %p144 = por %p142, %p143
    %p145 = scmp.ne.s32.totalorder %s134, %s135
    %p146 = scmp.eq.s32.totalorder %s16, 0
    %p147 = por %p145, %p146
    %p148 = scmp.ne.s32.totalorder %s134, %s135
    %p149 = scmp.eq.s32.totalorder %s17, 1
    %p150 = por %p148, %p149
    %p152 = scmp.ne.s32.totalorder %s135, %s151
    %p153 = scmp.eq.s32.totalorder %s17, 0
    %p154 = por %p152, %p153
    %p155 = scmp.le.s32.totalorder 1, %s11
    %p156 = scmp.lt.s32.totalorder %s11, 3
    %p157 = pnand %p155, %p156
    %p158 = pneg %p157
    // Predicated region
    $region9: #{simple_cnn_forward.3} parent=5 // pred_check
      _
    $region10: #{simple_cnn_forward.3} parent=5 // pred_check_branch
      %160 = sbr.rel (%p157) target = $region12
    $region11: #{simple_cnn_forward.3} parent=5 // pred_region
      %s161 = ssub.s32 %s11, 1
      // Predicated region
      $region13: #{simple_cnn_forward.3} parent=11 // pred_check
        %p162 = pneg %p58
      $region14: #{simple_cnn_forward.3} parent=11 // pred_check_branch
        %164 = sbr.rel (%p162) target = $region16
      $region15: #{simple_cnn_forward.3} parent=11 // pred_region
        _
      $region16: #{simple_cnn_forward.3} parent=11 // pred_fallthru
        _
      // Predicated region
      $region17: #{simple_cnn_forward.3} parent=11 // pred_check
        %p165 = pneg %p79
      $region18: #{simple_cnn_forward.3} parent=11 // pred_check_branch
        %167 = sbr.rel (%p165) target = $region20
      $region19: #{simple_cnn_forward.3} parent=11 // pred_region
        _
      $region20: #{simple_cnn_forward.3} parent=11 // pred_fallthru
        _
      // Predicated region
      $region21: #{simple_cnn_forward.3} parent=11 // pred_check
        %p168 = pneg %p100
      $region22: #{simple_cnn_forward.3} parent=11 // pred_check_branch
        %170 = sbr.rel (%p168) target = $region24
      $region23: #{simple_cnn_forward.3} parent=11 // pred_region
        _
      $region24: #{simple_cnn_forward.3} parent=11 // pred_fallthru
        _
      // Predicated region
      $region25: #{simple_cnn_forward.3} parent=11 // pred_check
        %p171 = pneg %p121
      $region26: #{simple_cnn_forward.3} parent=11 // pred_check_branch
        %173 = sbr.rel (%p171) target = $region28
      $region27: #{simple_cnn_forward.3} parent=11 // pred_region
        _
      $region28: #{simple_cnn_forward.3} parent=11 // pred_fallthru
        _
    $region12: #{simple_cnn_forward.3} parent=5 // pred_fallthru
      _
    %p174 = scmp.lt.s32.totalorder %s11, 2
    // Predicated region
    $region29: #{simple_cnn_forward.3} parent=5 // pred_check
      %p175 = pneg %p174
    $region30: #{simple_cnn_forward.3} parent=5 // pred_check_branch
      %177 = sbr.rel (%p175) target = $region32
    $region31: #{simple_cnn_forward.3} parent=5 // pred_region
      // Predicated region
      $region33: #{simple_cnn_forward.3} parent=31 // pred_check
        %p178 = pneg %p31
      $region34: #{simple_cnn_forward.3} parent=31 // pred_check_branch
        %180 = sbr.rel (%p178) target = $region36
      $region35: #{simple_cnn_forward.3} parent=31 // pred_region
        %p181 = scmp.lt.s32.totalorder %s11, 1
        %s182 = scalar_select %p181, %s11, 1
        %s183 = smul.addr %s182, 72
        %s184 = smul.addr %s183, 4
        %s185 = scalar_lea.vmem %s0, %s184
      $region36: #{simple_cnn_forward.3} parent=31 // pred_fallthru
        _
    $region32: #{simple_cnn_forward.3} parent=5 // pred_fallthru
      _
    %p186 = scmp.le.s32.totalorder 1, %s11
    %p187 = scmp.lt.s32.totalorder %s11, 3
    %p188 = pnand %p186, %p187
    %p189 = pneg %p188
    // Predicated region
    $region37: #{simple_cnn_forward.3} parent=5 // pred_check
      _
    $region38: #{simple_cnn_forward.3} parent=5 // pred_check_branch
      %191 = sbr.rel (%p188) target = $region40
    $region39: #{simple_cnn_forward.3} parent=5 // pred_region
      %s192 = ssub.s32 %s11, 1
      %p193 = scmp.lt.s32.totalorder %s16, 1
      %s194 = scalar_select %p193, %s16, 1
      %s195 = smul.addr %s194, 72
      %s196 = smul.addr %s195, 4
      %s197 = scalar_lea.vmem %s0, %s196
      %p198 = pneg %p37
      %p199 = pneg %p34
      %p200 = pneg %p58
      %p201 = pneg %p55
      %p202 = pneg %p79
      %p203 = pneg %p76
      %p204 = pneg %p100
      %p205 = pneg %p97
      %p206 = pneg %p121
      %p207 = pneg %p118
      %p208 = pneg %p147
      %p209 = pneg %p144
      %p210 = scmp.lt.s32.totalorder %s16, 1
      %s211 = scalar_select %p210, %s16, 1
      %s212 = smul.addr %s211, 2
      %s213 = smul.addr %s212, 8
      %s214 = scalar_lea.vmem %s5, %s213
      %p215 = scmp.lt.s32.totalorder %s16, 1
      %s216 = scalar_select %p215, %s16, 1
      %s217 = smul.addr %s216, 72
      %s218 = smul.addr %s217, 4
      %s219 = scalar_lea.vmem %s0, %s218
      %p220 = scmp.lt.s32.totalorder %s16, 1
      %s221 = scalar_select %p220, %s16, 1
      %s222 = smul.addr %s221, 2
      %s223 = smul.addr %s222, 8
      %s224 = scalar_lea.vmem %s5, %s223
      %v226 = vld [vmem:[%s1] sm:$0xff]
      %v227 = vld [vmem:[%s1 + $0x8] sm:$0xff]
      %v228 = vld [vmem:[%s1 + $0x10] sm:$0xff]
      %v229 = vld [vmem:[%s1 + $0x18] sm:$0xff]
      %v230 = vld [vmem:[%s219] sm:$0xf]
      %v231 = vld [vmem:[%s219 + $0x4] sm:$0xf]
      %v232 = vld [vmem:[%s219 + $0x8] sm:$0xf]
      %v233 = vld [vmem:[%s219 + $0xc] sm:$0xf]
      %v234 = vld [vmem:[%s219 + $0x10] sm:$0xf]
      %v235 = vld [vmem:[%s219 + $0x14] sm:$0xf]
      %v236 = vld [vmem:[%s219 + $0x18] sm:$0xf]
      %v237 = vld [vmem:[%s219 + $0x1c] sm:$0xf]
      %v238 = vld [vmem:[%s219 + $0x20] sm:$0xf]
      %v239 = vld [vmem:[%s219 + $0x24] sm:$0xf]
      %v240 = vld [vmem:[%s219 + $0x28] sm:$0xf]
      %v241 = vld [vmem:[%s219 + $0x2c] sm:$0xf]
      %v242 = vld [vmem:[%s219 + $0x30] sm:$0xf]
      %v243 = vld [vmem:[%s219 + $0x34] sm:$0xf]
      %v244 = vld [vmem:[%s219 + $0x38] sm:$0xf]
      %v245 = vld [vmem:[%s219 + $0x3c] sm:$0xf]
      %v246 = vld [vmem:[%s219 + $0x40] sm:$0xf]
      %v247 = vld [vmem:[%s219 + $0x44] sm:$0xf]
      %v252 = vunpack.c.l.b16 %v226
      %v253 = vunpack.c.h.b16 %v226
      %v254 = vunpack.c.l.b16 %v227
      %v255 = vunpack.c.h.b16 %v227
      %v256 = vunpack.c.l.b16 %v228
      %v257 = vunpack.c.h.b16 %v228
      %v258 = vunpack.c.l.b16 %v229
      %v259 = vunpack.c.h.b16 %v229
      %v260 = vpack.c.b16 %v254, %v252
      %v261 = vpack.c.b16 %v255, %v253
      %v262 = vpack.c.b16 %v258, %v256
      %v263 = vpack.c.b16 %v259, %v257
      %v284 = vunpack.c.l.b16 %v230
      %v285 = vunpack.c.l.b16 %v231
      %v286 = vunpack.c.l.b16 %v232
      %v287 = vunpack.c.l.b16 %v233
      %v288 = vunpack.c.l.b16 %v234
      %v289 = vunpack.c.l.b16 %v235
      %v290 = vunpack.c.l.b16 %v236
      %v291 = vunpack.c.l.b16 %v237
      %v292 = vunpack.c.l.b16 %v238
      %v293 = vunpack.c.l.b16 %v239
      %v294 = vunpack.c.l.b16 %v240
      %v295 = vunpack.c.l.b16 %v241
      %v296 = vunpack.c.l.b16 %v242
      %v297 = vunpack.c.l.b16 %v243
      %v298 = vunpack.c.l.b16 %v244
      %v299 = vunpack.c.l.b16 %v245
      %v300 = vunpack.c.l.b16 %v246
      %v301 = vunpack.c.l.b16 %v247
      %v302 = vpack.c.b16 %v285, %v284
      %v303 = vpack.c.b16 %v287, %v286
      %v304 = vpack.c.b16 %v289, %v288
      %v305 = vpack.c.b16 %v291, %v290
      %v306 = vpack.c.b16 %v293, %v292
      %v307 = vpack.c.b16 %v295, %v294
      %v308 = vpack.c.b16 %v297, %v296
      %v309 = vpack.c.b16 %v299, %v298
      %v310 = vpack.c.b16 %v301, %v300
      %vm320 = vcmask 130048
      %v322 = vsel %vm320, %v261, 0
      %v325 = vsel %vm320, %v263, 0
      %327 = vmatprep.subr.bf16.mxu0 0
      %328 = vmatpush1.bf16.msra.mxu0 %v302
      %329 = vmatprep.subr.bf16.mxu0 0
      %330 = vmatpush1.bf16.msra.mxu0 %v303
      %331 = vmatprep.subr.bf16.mxu0 0
      %332 = vmatpush1.bf16.msra.mxu0 %v304
      %333 = vmatprep.subr.bf16.mxu0 0
      %334 = vmatpush1.bf16.msra.mxu0 %v305
      %335 = vmatprep.subr.bf16.mxu0 0
      %336 = vmatpush1.bf16.msra.mxu0 %v306
      %337 = vmatprep.subr.bf16.mxu0 0
      %338 = vmatpush1.bf16.msra.mxu0 %v307
      %339 = vmatprep.subr.bf16.mxu0 0
      %340 = vmatpush1.bf16.msra.mxu0 %v308
      %341 = vmatprep.subr.bf16.mxu0 0
      %342 = vmatpush1.bf16.msra.mxu0 %v309
      %343 = vmatprep.subr.bf16.mxu0 0
      %344 = vmatpush1.bf16.msra.mxu0 %v310
      %345 = vmatprep.subr.bf16.mxu0 0
      %346 = vmatpush1.bf16.msra.mxu0 0
      %347 = vmatprep.subr.bf16.mxu0 0
      %348 = vmatpush1.bf16.msra.mxu0 0
      %349 = vmatprep.subr.bf16.mxu0 0
      %350 = vmatpush1.bf16.msra.mxu0 0
      %351 = vmatprep.subr.bf16.mxu0 0
      %352 = vmatpush1.bf16.msra.mxu0 0
      %353 = vmatprep.subr.bf16.mxu0 0
      %354 = vmatpush1.bf16.msra.mxu0 0
      %355 = vmatprep.subr.bf16.mxu0 0
      %356 = vmatpush1.bf16.msra.mxu0 0
      %357 = vmatprep.subr.bf16.mxu0 0
      %358 = vmatpush1.bf16.msra.mxu0 0
      %359 = vmatprep.mubr.bf16.mxu0 %v322
      %360 = vmatmul.mubr.bf16.gmra.mrb[0].mxu0 %v260
      %v361 = vpop.f32.mrb[0].mxu0
      %v362 = vadd.f32 0.0, %v361
      %v363 = vpop.f32.mrb[0].mxu0
      %v364 = vpop.f32.mrb[0].mxu0
      %v365 = vadd.f32 0.0, %v364
      %v366 = vpop.f32.mrb[0].mxu0
      %367 = vmatprep.mubr.bf16.mxu0 %v325
      %368 = vmatmul.mubr.bf16.gmra.mrb[0].mxu0 %v262
      %v369 = vpop.f32.mrb[0].mxu0
      %v370 = vadd.f32 0.0, %v369
      %v371 = vpop.f32.mrb[0].mxu0
      %v372 = vpop.f32.mrb[0].mxu0
      %v373 = vadd.f32 0.0, %v372
      %v374 = vpop.f32.mrb[0].mxu0
      %375 = vdwg.mxu0
      %s376 = scalar_lea.vmem %s219, 72
      %v377 = vld [vmem:[%s376] sm:$0xf]
      %v378 = vld [vmem:[%s376 + $0x4] sm:$0xf]
      %v379 = vld [vmem:[%s376 + $0x8] sm:$0xf]
      %v380 = vld [vmem:[%s376 + $0xc] sm:$0xf]
      %v381 = vld [vmem:[%s376 + $0x10] sm:$0xf]
      %v382 = vld [vmem:[%s376 + $0x14] sm:$0xf]
      %v383 = vld [vmem:[%s376 + $0x18] sm:$0xf]
      %v384 = vld [vmem:[%s376 + $0x1c] sm:$0xf]
      %v385 = vld [vmem:[%s376 + $0x20] sm:$0xf]
      %v386 = vld [vmem:[%s376 + $0x24] sm:$0xf]
      %v387 = vld [vmem:[%s376 + $0x28] sm:$0xf]
      %v388 = vld [vmem:[%s376 + $0x2c] sm:$0xf]
      %v389 = vld [vmem:[%s376 + $0x30] sm:$0xf]
      %v390 = vld [vmem:[%s376 + $0x34] sm:$0xf]
      %v391 = vld [vmem:[%s376 + $0x38] sm:$0xf]
      %v392 = vld [vmem:[%s376 + $0x3c] sm:$0xf]
      %v393 = vld [vmem:[%s376 + $0x40] sm:$0xf]
      %v394 = vld [vmem:[%s376 + $0x44] sm:$0xf]
      %v413 = vunpack.c.l.b16 %v377
      %v414 = vunpack.c.l.b16 %v378
      %v415 = vunpack.c.l.b16 %v379
      %v416 = vunpack.c.l.b16 %v380
      %v417 = vunpack.c.l.b16 %v381
      %v418 = vunpack.c.l.b16 %v382
      %v419 = vunpack.c.l.b16 %v383
      %v420 = vunpack.c.l.b16 %v384
      %v421 = vunpack.c.l.b16 %v385
      %v422 = vunpack.c.l.b16 %v386
      %v423 = vunpack.c.l.b16 %v387
      %v424 = vunpack.c.l.b16 %v388
      %v425 = vunpack.c.l.b16 %v389
      %v426 = vunpack.c.l.b16 %v390
      %v427 = vunpack.c.l.b16 %v391
      %v428 = vunpack.c.l.b16 %v392
      %v429 = vunpack.c.l.b16 %v393
      %v430 = vunpack.c.l.b16 %v394
      %v431 = vpack.c.b16 %v414, %v413
      %v432 = vpack.c.b16 %v416, %v415
      %v433 = vpack.c.b16 %v418, %v417
      %v434 = vpack.c.b16 %v420, %v419
      %v435 = vpack.c.b16 %v422, %v421
      %v436 = vpack.c.b16 %v424, %v423
      %v437 = vpack.c.b16 %v426, %v425
      %v438 = vpack.c.b16 %v428, %v427
      %v439 = vpack.c.b16 %v430, %v429
      %449 = vmatprep.subr.bf16.mxu0 0
      %450 = vmatpush1.bf16.msra.mxu0 %v431
      %451 = vmatprep.subr.bf16.mxu0 0
      %452 = vmatpush1.bf16.msra.mxu0 %v432
      %453 = vmatprep.subr.bf16.mxu0 0
      %454 = vmatpush1.bf16.msra.mxu0 %v433
      %455 = vmatprep.subr.bf16.mxu0 0
      %456 = vmatpush1.bf16.msra.mxu0 %v434
      %457 = vmatprep.subr.bf16.mxu0 0
      %458 = vmatpush1.bf16.msra.mxu0 %v435
      %459 = vmatprep.subr.bf16.mxu0 0
      %460 = vmatpush1.bf16.msra.mxu0 %v436
      %461 = vmatprep.subr.bf16.mxu0 0
      %462 = vmatpush1.bf16.msra.mxu0 %v437
      %463 = vmatprep.subr.bf16.mxu0 0
      %464 = vmatpush1.bf16.msra.mxu0 %v438
      %465 = vmatprep.subr.bf16.mxu0 0
      %466 = vmatpush1.bf16.msra.mxu0 %v439
      %467 = vmatprep.subr.bf16.mxu0 0
      %468 = vmatpush1.bf16.msra.mxu0 0
      %469 = vmatprep.subr.bf16.mxu0 0
      %470 = vmatpush1.bf16.msra.mxu0 0
      %471 = vmatprep.subr.bf16.mxu0 0
      %472 = vmatpush1.bf16.msra.mxu0 0
      %473 = vmatprep.subr.bf16.mxu0 0
      %474 = vmatpush1.bf16.msra.mxu0 0
      %475 = vmatprep.subr.bf16.mxu0 0
      %476 = vmatpush1.bf16.msra.mxu0 0
      %477 = vmatprep.subr.bf16.mxu0 0
      %478 = vmatpush1.bf16.msra.mxu0 0
      %479 = vmatprep.subr.bf16.mxu0 0
      %480 = vmatpush1.bf16.msra.mxu0 0
      %481 = vmatprep.mubr.bf16.mxu0 %v322
      %482 = vmatmul.mubr.bf16.gmra.mrb[0].mxu0 %v260
      %v483 = vpop.f32.mrb[0].mxu0
      %v484 = vadd.f32 0.0, %v483
      %v485 = vpop.f32.mrb[0].mxu0
      %v486 = vpop.f32.mrb[0].mxu0
      %v487 = vadd.f32 0.0, %v486
      %v488 = vpop.f32.mrb[0].mxu0
      %489 = vmatprep.mubr.bf16.mxu0 %v325
      %490 = vmatmul.mubr.bf16.gmra.mrb[0].mxu0 %v262
      %v491 = vpop.f32.mrb[0].mxu0
      %v492 = vadd.f32 0.0, %v491
      %v493 = vpop.f32.mrb[0].mxu0
      %v494 = vpop.f32.mrb[0].mxu0
      %v495 = vadd.f32 0.0, %v494
      %v496 = vpop.f32.mrb[0].mxu0
      %497 = vdwg.mxu0
      %v498 = vmax.f32 %v362, %v484
      %v499 = vmax.f32 %v365, %v487
      %v500 = vmax.f32 %v370, %v492
      %v501 = vmax.f32 %v373, %v495
      %s502 = scalar_lea.vmem %s219, 144
      %v503 = vld [vmem:[%s502] sm:$0xf]
      %v504 = vld [vmem:[%s502 + $0x4] sm:$0xf]
      %v505 = vld [vmem:[%s502 + $0x8] sm:$0xf]
      %v506 = vld [vmem:[%s502 + $0xc] sm:$0xf]
      %v507 = vld [vmem:[%s502 + $0x10] sm:$0xf]
      %v508 = vld [vmem:[%s502 + $0x14] sm:$0xf]
      %v509 = vld [vmem:[%s502 + $0x18] sm:$0xf]
      %v510 = vld [vmem:[%s502 + $0x1c] sm:$0xf]
      %v511 = vld [vmem:[%s502 + $0x20] sm:$0xf]
      %v512 = vld [vmem:[%s502 + $0x24] sm:$0xf]
      %v513 = vld [vmem:[%s502 + $0x28] sm:$0xf]
      %v514 = vld [vmem:[%s502 + $0x2c] sm:$0xf]
      %v515 = vld [vmem:[%s502 + $0x30] sm:$0xf]
      %v516 = vld [vmem:[%s502 + $0x34] sm:$0xf]
      %v517 = vld [vmem:[%s502 + $0x38] sm:$0xf]
      %v518 = vld [vmem:[%s502 + $0x3c] sm:$0xf]
      %v519 = vld [vmem:[%s502 + $0x40] sm:$0xf]
      %v520 = vld [vmem:[%s502 + $0x44] sm:$0xf]
      %v539 = vunpack.c.l.b16 %v503
      %v540 = vunpack.c.l.b16 %v504
      %v541 = vunpack.c.l.b16 %v505
      %v542 = vunpack.c.l.b16 %v506
      %v543 = vunpack.c.l.b16 %v507
      %v544 = vunpack.c.l.b16 %v508
      %v545 = vunpack.c.l.b16 %v509
      %v546 = vunpack.c.l.b16 %v510
      %v547 = vunpack.c.l.b16 %v511
      %v548 = vunpack.c.l.b16 %v512
      %v549 = vunpack.c.l.b16 %v513
      %v550 = vunpack.c.l.b16 %v514
      %v551 = vunpack.c.l.b16 %v515
      %v552 = vunpack.c.l.b16 %v516
      %v553 = vunpack.c.l.b16 %v517
      %v554 = vunpack.c.l.b16 %v518
      %v555 = vunpack.c.l.b16 %v519
      %v556 = vunpack.c.l.b16 %v520
      %v557 = vpack.c.b16 %v540, %v539
      %v558 = vpack.c.b16 %v542, %v541
      %v559 = vpack.c.b16 %v544, %v543
      %v560 = vpack.c.b16 %v546, %v545
      %v561 = vpack.c.b16 %v548, %v547
      %v562 = vpack.c.b16 %v550, %v549
      %v563 = vpack.c.b16 %v552, %v551
      %v564 = vpack.c.b16 %v554, %v553
      %v565 = vpack.c.b16 %v556, %v555
      %575 = vmatprep.subr.bf16.mxu0 0
      %576 = vmatpush1.bf16.msra.mxu0 %v557
      %577 = vmatprep.subr.bf16.mxu0 0
      %578 = vmatpush1.bf16.msra.mxu0 %v558
      %579 = vmatprep.subr.bf16.mxu0 0
      %580 = vmatpush1.bf16.msra.mxu0 %v559
      %581 = vmatprep.subr.bf16.mxu0 0
      %582 = vmatpush1.bf16.msra.mxu0 %v560
      %583 = vmatprep.subr.bf16.mxu0 0
      %584 = vmatpush1.bf16.msra.mxu0 %v561
      %585 = vmatprep.subr.bf16.mxu0 0
      %586 = vmatpush1.bf16.msra.mxu0 %v562
      %587 = vmatprep.subr.bf16.mxu0 0
      %588 = vmatpush1.bf16.msra.mxu0 %v563
      %589 = vmatprep.subr.bf16.mxu0 0
      %590 = vmatpush1.bf16.msra.mxu0 %v564
      %591 = vmatprep.subr.bf16.mxu0 0
      %592 = vmatpush1.bf16.msra.mxu0 %v565
      %593 = vmatprep.subr.bf16.mxu0 0
      %594 = vmatpush1.bf16.msra.mxu0 0
      %595 = vmatprep.subr.bf16.mxu0 0
      %596 = vmatpush1.bf16.msra.mxu0 0
      %597 = vmatprep.subr.bf16.mxu0 0
      %598 = vmatpush1.bf16.msra.mxu0 0
      %599 = vmatprep.subr.bf16.mxu0 0
      %600 = vmatpush1.bf16.msra.mxu0 0
      %601 = vmatprep.subr.bf16.mxu0 0
      %602 = vmatpush1.bf16.msra.mxu0 0
      %603 = vmatprep.subr.bf16.mxu0 0
      %604 = vmatpush1.bf16.msra.mxu0 0
      %605 = vmatprep.subr.bf16.mxu0 0
      %606 = vmatpush1.bf16.msra.mxu0 0
      %607 = vmatprep.mubr.bf16.mxu0 %v322
      %608 = vmatmul.mubr.bf16.gmra.mrb[0].mxu0 %v260
      %v609 = vpop.f32.mrb[0].mxu0
      %v610 = vadd.f32 0.0, %v609
      %v611 = vpop.f32.mrb[0].mxu0
      %v612 = vpop.f32.mrb[0].mxu0
      %v613 = vadd.f32 0.0, %v612
      %v614 = vpop.f32.mrb[0].mxu0
      %615 = vmatprep.mubr.bf16.mxu0 %v325
      %616 = vmatmul.mubr.bf16.gmra.mrb[0].mxu0 %v262
      %v617 = vpop.f32.mrb[0].mxu0
      %v618 = vadd.f32 0.0, %v617
      %v619 = vpop.f32.mrb[0].mxu0
      %v620 = vpop.f32.mrb[0].mxu0
      %v621 = vadd.f32 0.0, %v620
      %v622 = vpop.f32.mrb[0].mxu0
      %623 = vdwg.mxu0
      %v624 = vmax.f32 %v498, %v610
      %v625 = vmax.f32 %v499, %v613
      %v626 = vmax.f32 %v500, %v618
      %v627 = vmax.f32 %v501, %v621
      %s628 = scalar_lea.vmem %s219, 216
      %v629 = vld [vmem:[%s628] sm:$0xf]
      %v630 = vld [vmem:[%s628 + $0x4] sm:$0xf]
      %v631 = vld [vmem:[%s628 + $0x8] sm:$0xf]
      %v632 = vld [vmem:[%s628 + $0xc] sm:$0xf]
      %v633 = vld [vmem:[%s628 + $0x10] sm:$0xf]
      %v634 = vld [vmem:[%s628 + $0x14] sm:$0xf]
      %v635 = vld [vmem:[%s628 + $0x18] sm:$0xf]
      %v636 = vld [vmem:[%s628 + $0x1c] sm:$0xf]
      %v637 = vld [vmem:[%s628 + $0x20] sm:$0xf]
      %v638 = vld [vmem:[%s628 + $0x24] sm:$0xf]
      %v639 = vld [vmem:[%s628 + $0x28] sm:$0xf]
      %v640 = vld [vmem:[%s628 + $0x2c] sm:$0xf]
      %v641 = vld [vmem:[%s628 + $0x30] sm:$0xf]
      %v642 = vld [vmem:[%s628 + $0x34] sm:$0xf]
      %v643 = vld [vmem:[%s628 + $0x38] sm:$0xf]
      %v644 = vld [vmem:[%s628 + $0x3c] sm:$0xf]
      %v645 = vld [vmem:[%s628 + $0x40] sm:$0xf]
      %v646 = vld [vmem:[%s628 + $0x44] sm:$0xf]
      %v665 = vunpack.c.l.b16 %v629
      %v666 = vunpack.c.l.b16 %v630
      %v667 = vunpack.c.l.b16 %v631
      %v668 = vunpack.c.l.b16 %v632
      %v669 = vunpack.c.l.b16 %v633
      %v670 = vunpack.c.l.b16 %v634
      %v671 = vunpack.c.l.b16 %v635
      %v672 = vunpack.c.l.b16 %v636
      %v673 = vunpack.c.l.b16 %v637
      %v674 = vunpack.c.l.b16 %v638
      %v675 = vunpack.c.l.b16 %v639
      %v676 = vunpack.c.l.b16 %v640
      %v677 = vunpack.c.l.b16 %v641
      %v678 = vunpack.c.l.b16 %v642
      %v679 = vunpack.c.l.b16 %v643
      %v680 = vunpack.c.l.b16 %v644
      %v681 = vunpack.c.l.b16 %v645
      %v682 = vunpack.c.l.b16 %v646
      %v683 = vpack.c.b16 %v666, %v665
      %v684 = vpack.c.b16 %v668, %v667
      %v685 = vpack.c.b16 %v670, %v669
      %v686 = vpack.c.b16 %v672, %v671
      %v687 = vpack.c.b16 %v674, %v673
      %v688 = vpack.c.b16 %v676, %v675
      %v689 = vpack.c.b16 %v678, %v677
      %v690 = vpack.c.b16 %v680, %v679
      %v691 = vpack.c.b16 %v682, %v681
      %701 = vmatprep.subr.bf16.mxu0 0
      %702 = vmatpush1.bf16.msra.mxu0 %v683
      %703 = vmatprep.subr.bf16.mxu0 0
      %704 = vmatpush1.bf16.msra.mxu0 %v684
      %705 = vmatprep.subr.bf16.mxu0 0
      %706 = vmatpush1.bf16.msra.mxu0 %v685
      %707 = vmatprep.subr.bf16.mxu0 0
      %708 = vmatpush1.bf16.msra.mxu0 %v686
      %709 = vmatprep.subr.bf16.mxu0 0
      %710 = vmatpush1.bf16.msra.mxu0 %v687
      %711 = vmatprep.subr.bf16.mxu0 0
      %712 = vmatpush1.bf16.msra.mxu0 %v688
      %713 = vmatprep.subr.bf16.mxu0 0
      %714 = vmatpush1.bf16.msra.mxu0 %v689
      %715 = vmatprep.subr.bf16.mxu0 0
      %716 = vmatpush1.bf16.msra.mxu0 %v690
      %717 = vmatprep.subr.bf16.mxu0 0
      %718 = vmatpush1.bf16.msra.mxu0 %v691
      %719 = vmatprep.subr.bf16.mxu0 0
      %720 = vmatpush1.bf16.msra.mxu0 0
      %721 = vmatprep.subr.bf16.mxu0 0
      %722 = vmatpush1.bf16.msra.mxu0 0
      %723 = vmatprep.subr.bf16.mxu0 0
      %724 = vmatpush1.bf16.msra.mxu0 0
      %725 = vmatprep.subr.bf16.mxu0 0
      %726 = vmatpush1.bf16.msra.mxu0 0
      %727 = vmatprep.subr.bf16.mxu0 0
      %728 = vmatpush1.bf16.msra.mxu0 0
      %729 = vmatprep.subr.bf16.mxu0 0
      %730 = vmatpush1.bf16.msra.mxu0 0
      %731 = vmatprep.subr.bf16.mxu0 0
      %732 = vmatpush1.bf16.msra.mxu0 0
      %733 = vmatprep.mubr.bf16.mxu0 %v322
      %734 = vmatmul.mubr.bf16.gmra.mrb[0].mxu0 %v260
      %v735 = vpop.f32.mrb[0].mxu0
      %v736 = vadd.f32 0.0, %v735
      %v737 = vpop.f32.mrb[0].mxu0
      %v738 = vpop.f32.mrb[0].mxu0
      %v739 = vadd.f32 0.0, %v738
      %v740 = vpop.f32.mrb[0].mxu0
      %741 = vmatprep.mubr.bf16.mxu0 %v325
      %742 = vmatmul.mubr.bf16.gmra.mrb[0].mxu0 %v262
      %v743 = vpop.f32.mrb[0].mxu0
      %v744 = vadd.f32 0.0, %v743
      %v745 = vpop.f32.mrb[0].mxu0
      %v746 = vpop.f32.mrb[0].mxu0
      %v747 = vadd.f32 0.0, %v746
      %v748 = vpop.f32.mrb[0].mxu0
      %749 = vdwg.mxu0
      %v750 = vmax.f32 %v624, %v736
      %v751 = vmax.f32 %v625, %v739
      %v752 = vmax.f32 %v626, %v744
      %v753 = vmax.f32 %v627, %v747
      %v754 = vld [vmem:[%s2] sm:$0xff]
      %v755 = vld [vmem:[%s2 + $0x8] sm:$0xff]
      %v756 = vld [vmem:[%s2 + $0x10] sm:$0xff]
      %v757 = vld [vmem:[%s2 + $0x18] sm:$0xff]
      %759 = vset.pattern.permute.xlu0 0
      %760 = vperm.xlu0 %759, %v754
      %v761 = vpop.permute.xlu0 %760
      %764 = vset.pattern.permute.xlu0 0
      %765 = vperm.xlu0 %764, %v755
      %v766 = vpop.permute.xlu0 %765
      %769 = vset.pattern.permute.xlu0 0
      %770 = vperm.xlu0 %769, %v756
      %v771 = vpop.permute.xlu0 %770
      %774 = vset.pattern.permute.xlu0 0
      %775 = vperm.xlu0 %774, %v757
      %v776 = vpop.permute.xlu0 %775
      %v778 = vadd.f32 %v750, %v761
      %v779 = vadd.f32 %v751, %v766
      %v780 = vadd.f32 %v752, %v771
      %v781 = vadd.f32 %v753, %v776
      %v782 = vmax.f32 %v778, 0.0
      %v783 = vmax.f32 %v779, 0.0
      %v784 = vmax.f32 %v780, 0.0
      %v785 = vmax.f32 %v781, 0.0
      %v786 = vld [vmem:[%s3] sm:$0xff]
      %v787 = vld [vmem:[%s3 + $0x8] sm:$0xff]
      %v788 = vld [vmem:[%s3 + $0x10] sm:$0xff]
      %v789 = vld [vmem:[%s3 + $0x18] sm:$0xff]
      %v790 = vld [vmem:[%s3 + $0x20] sm:$0xff]
      %v791 = vld [vmem:[%s3 + $0x28] sm:$0xff]
      %v792 = vld [vmem:[%s3 + $0x30] sm:$0xff]
      %v793 = vld [vmem:[%s3 + $0x38] sm:$0xff]
      %v794 = vld [vmem:[%s3 + $0x40] sm:$0xff]
      %v795 = vld [vmem:[%s3 + $0x48] sm:$0xff]
      %v796 = vld [vmem:[%s3 + $0x50] sm:$0xff]
      %v797 = vld [vmem:[%s3 + $0x58] sm:$0xff]
      %v798 = vld [vmem:[%s3 + $0x60] sm:$0xff]
      %v799 = vld [vmem:[%s3 + $0x68] sm:$0xff]
      %v800 = vld [vmem:[%s3 + $0x70] sm:$0xff]
      %v801 = vld [vmem:[%s3 + $0x78] sm:$0xff]
      %v802 = vld [vmem:[%s3 + $0x80] sm:$0xff]
      %v803 = vld [vmem:[%s3 + $0x88] sm:$0xff]
      %v804 = vld [vmem:[%s3 + $0x90] sm:$0xff]
      %v805 = vld [vmem:[%s3 + $0x98] sm:$0xff]
      %v806 = vld [vmem:[%s3 + $0xa0] sm:$0xff]
      %v807 = vld [vmem:[%s3 + $0xa8] sm:$0xff]
      %v808 = vld [vmem:[%s3 + $0xb0] sm:$0xff]
      %v809 = vld [vmem:[%s3 + $0xb8] sm:$0xff]
      %v810 = vld [vmem:[%s3 + $0xc0] sm:$0xff]
      %v811 = vld [vmem:[%s3 + $0xc8] sm:$0xff]
      %v812 = vld [vmem:[%s3 + $0xd0] sm:$0xff]
      %v813 = vld [vmem:[%s3 + $0xd8] sm:$0xff]
      %v814 = vld [vmem:[%s3 + $0xe0] sm:$0xff]
      %v815 = vld [vmem:[%s3 + $0xe8] sm:$0xff]
      %v816 = vld [vmem:[%s3 + $0xf0] sm:$0xff]
      %v817 = vld [vmem:[%s3 + $0xf8] sm:$0xff]
      %v818 = vld [vmem:[%s3 + $0x100] sm:$0xff]
      %v819 = vld [vmem:[%s3 + $0x108] sm:$0xff]
      %v820 = vld [vmem:[%s3 + $0x110] sm:$0xff]
      %v821 = vld [vmem:[%s3 + $0x118] sm:$0xff]
      %v822 = vld [vmem:[%s3 + $0x120] sm:$0xff]
      %v823 = vld [vmem:[%s3 + $0x128] sm:$0xff]
      %v824 = vld [vmem:[%s3 + $0x130] sm:$0xff]
      %v825 = vld [vmem:[%s3 + $0x138] sm:$0xff]
      %v826 = vmul.f32 %v786, %v782
      %v827 = vmul.f32 %v787, %v783
      %v828 = vmul.f32 %v788, %v784
      %v829 = vmul.f32 %v789, %v785
      %v830 = vmul.f32 %v790, %v782
      %v831 = vmul.f32 %v791, %v783
      %v832 = vmul.f32 %v792, %v784
      %v833 = vmul.f32 %v793, %v785
      %v834 = vmul.f32 %v794, %v782
      %v835 = vmul.f32 %v795, %v783
      %v836 = vmul.f32 %v796, %v784
      %v837 = vmul.f32 %v797, %v785
      %v838 = vmul.f32 %v798, %v782
      %v839 = vmul.f32 %v799, %v783
      %v840 = vmul.f32 %v800, %v784
      %v841 = vmul.f32 %v801, %v785
      %v842 = vmul.f32 %v802, %v782
      %v843 = vmul.f32 %v803, %v783
      %v844 = vmul.f32 %v804, %v784
      %v845 = vmul.f32 %v805, %v785
      %v846 = vmul.f32 %v806, %v782
      %v847 = vmul.f32 %v807, %v783
      %v848 = vmul.f32 %v808, %v784
      %v849 = vmul.f32 %v809, %v785
      %v850 = vmul.f32 %v810, %v782
      %v851 = vmul.f32 %v811, %v783
      %v852 = vmul.f32 %v812, %v784
      %v853 = vmul.f32 %v813, %v785
      %v854 = vmul.f32 %v814, %v782
      %v855 = vmul.f32 %v815, %v783
      %v856 = vmul.f32 %v816, %v784
      %v857 = vmul.f32 %v817, %v785
      %v858 = vmul.f32 %v818, %v782
      %v859 = vmul.f32 %v819, %v783
      %v860 = vmul.f32 %v820, %v784
      %v861 = vmul.f32 %v821, %v785
      %v862 = vmul.f32 %v822, %v782
      %v863 = vmul.f32 %v823, %v783
      %v864 = vmul.f32 %v824, %v784
      %v865 = vmul.f32 %v825, %v785
      %vm866 = vcmask 523264
      %v867 = vsel %vm866, %v826, 0.0
      %868 = vadd.xlane.f32.xlu0 %v867
      %v869 = vpop.xlane.xlu0 %868
      %v870 = vsel %vm866, %v827, 0.0
      %871 = vadd.xlane.f32.xlu0 %v870
      %v872 = vpop.xlane.xlu0 %871
      %v873 = vsel %vm866, %v828, 0.0
      %874 = vadd.xlane.f32.xlu0 %v873
      %v875 = vpop.xlane.xlu0 %874
      %v876 = vsel %vm866, %v829, 0.0
      %877 = vadd.xlane.f32.xlu0 %v876
      %v878 = vpop.xlane.xlu0 %877
      %v879 = vsel %vm866, %v830, 0.0
      %880 = vadd.xlane.f32.xlu0 %v879
      %v881 = vpop.xlane.xlu0 %880
      %v882 = vsel %vm866, %v831, 0.0
      %883 = vadd.xlane.f32.xlu0 %v882
      %v884 = vpop.xlane.xlu0 %883
      %v885 = vsel %vm866, %v832, 0.0
      %886 = vadd.xlane.f32.xlu0 %v885
      %v887 = vpop.xlane.xlu0 %886
      %v888 = vsel %vm866, %v833, 0.0
      %889 = vadd.xlane.f32.xlu0 %v888
      %v890 = vpop.xlane.xlu0 %889
      %v891 = vsel %vm866, %v834, 0.0
      %892 = vadd.xlane.f32.xlu0 %v891
      %v893 = vpop.xlane.xlu0 %892
      %v894 = vsel %vm866, %v835, 0.0
      %895 = vadd.xlane.f32.xlu0 %v894
      %v896 = vpop.xlane.xlu0 %895
      %v897 = vsel %vm866, %v836, 0.0
      %898 = vadd.xlane.f32.xlu0 %v897
      %v899 = vpop.xlane.xlu0 %898
      %v900 = vsel %vm866, %v837, 0.0
      %901 = vadd.xlane.f32.xlu0 %v900
      %v902 = vpop.xlane.xlu0 %901
      %v903 = vsel %vm866, %v838, 0.0
      %904 = vadd.xlane.f32.xlu0 %v903
      %v905 = vpop.xlane.xlu0 %904
      %v906 = vsel %vm866, %v839, 0.0
      %907 = vadd.xlane.f32.xlu0 %v906
      %v908 = vpop.xlane.xlu0 %907
      %v909 = vsel %vm866, %v840, 0.0
      %910 = vadd.xlane.f32.xlu0 %v909
      %v911 = vpop.xlane.xlu0 %910
      %v912 = vsel %vm866, %v841, 0.0
      %913 = vadd.xlane.f32.xlu0 %v912
      %v914 = vpop.xlane.xlu0 %913
      %v915 = vsel %vm866, %v842, 0.0
      %916 = vadd.xlane.f32.xlu0 %v915
      %v917 = vpop.xlane.xlu0 %916
      %v918 = vsel %vm866, %v843, 0.0
      %919 = vadd.xlane.f32.xlu0 %v918
      %v920 = vpop.xlane.xlu0 %919
      %v921 = vsel %vm866, %v844, 0.0
      %922 = vadd.xlane.f32.xlu0 %v921
      %v923 = vpop.xlane.xlu0 %922
      %v924 = vsel %vm866, %v845, 0.0
      %925 = vadd.xlane.f32.xlu0 %v924
      %v926 = vpop.xlane.xlu0 %925
      %v927 = vsel %vm866, %v846, 0.0
      %928 = vadd.xlane.f32.xlu0 %v927
      %v929 = vpop.xlane.xlu0 %928
      %v930 = vsel %vm866, %v847, 0.0
      %931 = vadd.xlane.f32.xlu0 %v930
      %v932 = vpop.xlane.xlu0 %931
      %v933 = vsel %vm866, %v848, 0.0
      %934 = vadd.xlane.f32.xlu0 %v933
      %v935 = vpop.xlane.xlu0 %934
      %v936 = vsel %vm866, %v849, 0.0
      %937 = vadd.xlane.f32.xlu0 %v936
      %v938 = vpop.xlane.xlu0 %937
      %v939 = vsel %vm866, %v850, 0.0
      %940 = vadd.xlane.f32.xlu0 %v939
      %v941 = vpop.xlane.xlu0 %940
      %v942 = vsel %vm866, %v851, 0.0
      %943 = vadd.xlane.f32.xlu0 %v942
      %v944 = vpop.xlane.xlu0 %943
      %v945 = vsel %vm866, %v852, 0.0
      %946 = vadd.xlane.f32.xlu0 %v945
      %v947 = vpop.xlane.xlu0 %946
      %v948 = vsel %vm866, %v853, 0.0
      %949 = vadd.xlane.f32.xlu0 %v948
      %v950 = vpop.xlane.xlu0 %949
      %v951 = vsel %vm866, %v854, 0.0
      %952 = vadd.xlane.f32.xlu0 %v951
      %v953 = vpop.xlane.xlu0 %952
      %v954 = vsel %vm866, %v855, 0.0
      %955 = vadd.xlane.f32.xlu0 %v954
      %v956 = vpop.xlane.xlu0 %955
      %v957 = vsel %vm866, %v856, 0.0
      %958 = vadd.xlane.f32.xlu0 %v957
      %v959 = vpop.xlane.xlu0 %958
      %v960 = vsel %vm866, %v857, 0.0
      %961 = vadd.xlane.f32.xlu0 %v960
      %v962 = vpop.xlane.xlu0 %961
      %v963 = vsel %vm866, %v858, 0.0
      %964 = vadd.xlane.f32.xlu0 %v963
      %v965 = vpop.xlane.xlu0 %964
      %v966 = vsel %vm866, %v859, 0.0
      %967 = vadd.xlane.f32.xlu0 %v966
      %v968 = vpop.xlane.xlu0 %967
      %v969 = vsel %vm866, %v860, 0.0
      %970 = vadd.xlane.f32.xlu0 %v969
      %v971 = vpop.xlane.xlu0 %970
      %v972 = vsel %vm866, %v861, 0.0
      %973 = vadd.xlane.f32.xlu0 %v972
      %v974 = vpop.xlane.xlu0 %973
      %v975 = vsel %vm866, %v862, 0.0
      %976 = vadd.xlane.f32.xlu0 %v975
      %v977 = vpop.xlane.xlu0 %976
      %v978 = vsel %vm866, %v863, 0.0
      %979 = vadd.xlane.f32.xlu0 %v978
      %v980 = vpop.xlane.xlu0 %979
      %v981 = vsel %vm866, %v864, 0.0
      %982 = vadd.xlane.f32.xlu0 %v981
      %v983 = vpop.xlane.xlu0 %982
      %v984 = vsel %vm866, %v865, 0.0
      %985 = vadd.xlane.f32.xlu0 %v984
      %v986 = vpop.xlane.xlu0 %985
      %v1027 = vlaneseq
      %v1028 = vand.u32 %v1027, 127
      %v1029 = vlaneseq
      %v1030 = vshrl.u32 %v1029, 7
      %v1031 = vsub.s32 %v1028, %v1030
      %v1032 = vrot.slane %v869, %v1031
      %v1033 = vadd.s32 %v1028, 4294967288
      %v1034 = vlaneseq
      %v1035 = vshrl.u32 %v1034, 7
      %v1036 = vsub.s32 %v1033, %v1035
      %v1037 = vrot.slane %v872, %v1036
      %vm1038 = vcmask 130112
      %v1039 = vsel %vm1038, %v1037, %v1032
      %v1040 = vadd.s32 %v1028, 4294967280
      %v1041 = vlaneseq
      %v1042 = vshrl.u32 %v1041, 7
      %v1043 = vsub.s32 %v1040, %v1042
      %v1044 = vrot.slane %v875, %v1043
      %vm1045 = vcmask 195712
      %v1046 = vsel %vm1045, %v1044, %v1039
      %v1047 = vadd.s32 %v1028, 4294967272
      %v1048 = vlaneseq
      %v1049 = vshrl.u32 %v1048, 7
      %v1050 = vsub.s32 %v1047, %v1049
      %v1051 = vrot.slane %v878, %v1050
      %vm1052 = vcmask 261312
      %v1053 = vsel %vm1052, %v1051, %v1046
      %v1054 = vlaneseq
      %v1055 = vshrl.u32 %v1054, 7
      %v1056 = vsub.s32 %v1028, %v1055
      %v1057 = vrot.slane %v881, %v1056
      %v1058 = vlaneseq
      %v1059 = vshrl.u32 %v1058, 7
      %v1060 = vsub.s32 %v1033, %v1059
      %v1061 = vrot.slane %v884, %v1060
      %v1062 = vsel %vm1038, %v1061, %v1057
      %v1063 = vlaneseq
      %v1064 = vshrl.u32 %v1063, 7
      %v1065 = vsub.s32 %v1040, %v1064
      %v1066 = vrot.slane %v887, %v1065
      %v1067 = vsel %vm1045, %v1066, %v1062
      %v1068 = vlaneseq
      %v1069 = vshrl.u32 %v1068, 7
      %v1070 = vsub.s32 %v1047, %v1069
      %v1071 = vrot.slane %v890, %v1070
      %v1072 = vsel %vm1052, %v1071, %v1067
      %v1073 = vlaneseq
      %v1074 = vshrl.u32 %v1073, 7
      %v1075 = vsub.s32 %v1028, %v1074
      %v1076 = vrot.slane %v893, %v1075
      %v1077 = vlaneseq
      %v1078 = vshrl.u32 %v1077, 7
      %v1079 = vsub.s32 %v1033, %v1078
      %v1080 = vrot.slane %v896, %v1079
      %v1081 = vsel %vm1038, %v1080, %v1076
      %v1082 = vlaneseq
      %v1083 = vshrl.u32 %v1082, 7
      %v1084 = vsub.s32 %v1040, %v1083
      %v1085 = vrot.slane %v899, %v1084
      %v1086 = vsel %vm1045, %v1085, %v1081
      %v1087 = vlaneseq
      %v1088 = vshrl.u32 %v1087, 7
      %v1089 = vsub.s32 %v1047, %v1088
      %v1090 = vrot.slane %v902, %v1089
      %v1091 = vsel %vm1052, %v1090, %v1086
      %v1092 = vlaneseq
      %v1093 = vshrl.u32 %v1092, 7
      %v1094 = vsub.s32 %v1028, %v1093
      %v1095 = vrot.slane %v905, %v1094
      %v1096 = vlaneseq
      %v1097 = vshrl.u32 %v1096, 7
      %v1098 = vsub.s32 %v1033, %v1097
      %v1099 = vrot.slane %v908, %v1098
      %v1100 = vsel %vm1038, %v1099, %v1095
      %v1101 = vlaneseq
      %v1102 = vshrl.u32 %v1101, 7
      %v1103 = vsub.s32 %v1040, %v1102
      %v1104 = vrot.slane %v911, %v1103
      %v1105 = vsel %vm1045, %v1104, %v1100
      %v1106 = vlaneseq
      %v1107 = vshrl.u32 %v1106, 7
      %v1108 = vsub.s32 %v1047, %v1107
      %v1109 = vrot.slane %v914, %v1108
      %v1110 = vsel %vm1052, %v1109, %v1105
      %v1111 = vlaneseq
      %v1112 = vshrl.u32 %v1111, 7
      %v1113 = vsub.s32 %v1028, %v1112
      %v1114 = vrot.slane %v917, %v1113
      %v1115 = vlaneseq
      %v1116 = vshrl.u32 %v1115, 7
      %v1117 = vsub.s32 %v1033, %v1116
      %v1118 = vrot.slane %v920, %v1117
      %v1119 = vsel %vm1038, %v1118, %v1114
      %v1120 = vlaneseq
      %v1121 = vshrl.u32 %v1120, 7
      %v1122 = vsub.s32 %v1040, %v1121
      %v1123 = vrot.slane %v923, %v1122
      %v1124 = vsel %vm1045, %v1123, %v1119
      %v1125 = vlaneseq
      %v1126 = vshrl.u32 %v1125, 7
      %v1127 = vsub.s32 %v1047, %v1126
      %v1128 = vrot.slane %v926, %v1127
      %v1129 = vsel %vm1052, %v1128, %v1124
      %v1130 = vlaneseq
      %v1131 = vshrl.u32 %v1130, 7
      %v1132 = vsub.s32 %v1028, %v1131
      %v1133 = vrot.slane %v929, %v1132
      %v1134 = vlaneseq
      %v1135 = vshrl.u32 %v1134, 7
      %v1136 = vsub.s32 %v1033, %v1135
      %v1137 = vrot.slane %v932, %v1136
      %v1138 = vsel %vm1038, %v1137, %v1133
      %v1139 = vlaneseq
      %v1140 = vshrl.u32 %v1139, 7
      %v1141 = vsub.s32 %v1040, %v1140
      %v1142 = vrot.slane %v935, %v1141
      %v1143 = vsel %vm1045, %v1142, %v1138
      %v1144 = vlaneseq
      %v1145 = vshrl.u32 %v1144, 7
      %v1146 = vsub.s32 %v1047, %v1145
      %v1147 = vrot.slane %v938, %v1146
      %v1148 = vsel %vm1052, %v1147, %v1143
      %v1149 = vlaneseq
      %v1150 = vshrl.u32 %v1149, 7
      %v1151 = vsub.s32 %v1028, %v1150
      %v1152 = vrot.slane %v941, %v1151
      %v1153 = vlaneseq
      %v1154 = vshrl.u32 %v1153, 7
      %v1155 = vsub.s32 %v1033, %v1154
      %v1156 = vrot.slane %v944, %v1155
      %v1157 = vsel %vm1038, %v1156, %v1152
      %v1158 = vlaneseq
      %v1159 = vshrl.u32 %v1158, 7
      %v1160 = vsub.s32 %v1040, %v1159
      %v1161 = vrot.slane %v947, %v1160
      %v1162 = vsel %vm1045, %v1161, %v1157
      %v1163 = vlaneseq
      %v1164 = vshrl.u32 %v1163, 7
      %v1165 = vsub.s32 %v1047, %v1164
      %v1166 = vrot.slane %v950, %v1165
      %v1167 = vsel %vm1052, %v1166, %v1162
      %v1168 = vlaneseq
      %v1169 = vshrl.u32 %v1168, 7
      %v1170 = vsub.s32 %v1028, %v1169
      %v1171 = vrot.slane %v953, %v1170
      %v1172 = vlaneseq
      %v1173 = vshrl.u32 %v1172, 7
      %v1174 = vsub.s32 %v1033, %v1173
      %v1175 = vrot.slane %v956, %v1174
      %v1176 = vsel %vm1038, %v1175, %v1171
      %v1177 = vlaneseq
      %v1178 = vshrl.u32 %v1177, 7
      %v1179 = vsub.s32 %v1040, %v1178
      %v1180 = vrot.slane %v959, %v1179
      %v1181 = vsel %vm1045, %v1180, %v1176
      %v1182 = vlaneseq
      %v1183 = vshrl.u32 %v1182, 7
      %v1184 = vsub.s32 %v1047, %v1183
      %v1185 = vrot.slane %v962, %v1184
      %v1186 = vsel %vm1052, %v1185, %v1181
      %v1187 = vlaneseq
      %v1188 = vshrl.u32 %v1187, 7
      %v1189 = vsub.s32 %v1028, %v1188
      %v1190 = vrot.slane %v965, %v1189
      %v1191 = vlaneseq
      %v1192 = vshrl.u32 %v1191, 7
      %v1193 = vsub.s32 %v1033, %v1192
      %v1194 = vrot.slane %v968, %v1193
      %v1195 = vsel %vm1038, %v1194, %v1190
      %v1196 = vlaneseq
      %v1197 = vshrl.u32 %v1196, 7
      %v1198 = vsub.s32 %v1040, %v1197
      %v1199 = vrot.slane %v971, %v1198
      %v1200 = vsel %vm1045, %v1199, %v1195
      %v1201 = vlaneseq
      %v1202 = vshrl.u32 %v1201, 7
      %v1203 = vsub.s32 %v1047, %v1202
      %v1204 = vrot.slane %v974, %v1203
      %v1205 = vsel %vm1052, %v1204, %v1200
      %v1206 = vlaneseq
      %v1207 = vshrl.u32 %v1206, 7
      %v1208 = vsub.s32 %v1028, %v1207
      %v1209 = vrot.slane %v977, %v1208
      %v1210 = vlaneseq
      %v1211 = vshrl.u32 %v1210, 7
      %v1212 = vsub.s32 %v1033, %v1211
      %v1213 = vrot.slane %v980, %v1212
      %v1214 = vsel %vm1038, %v1213, %v1209
      %v1215 = vlaneseq
      %v1216 = vshrl.u32 %v1215, 7
      %v1217 = vsub.s32 %v1040, %v1216
      %v1218 = vrot.slane %v983, %v1217
      %v1219 = vsel %vm1045, %v1218, %v1214
      %v1220 = vlaneseq
      %v1221 = vshrl.u32 %v1220, 7
      %v1222 = vsub.s32 %v1047, %v1221
      %v1223 = vrot.slane %v986, %v1222
      %v1224 = vsel %vm1052, %v1223, %v1219
      %vm1225 = vcmask 1041409
      %v1226 = vsel %vm1225, %v1072, %v1053
      %vm1227 = vcmask 1042434
      %v1228 = vsel %vm1227, %v1091, %v1226
      %vm1229 = vcmask 1043459
      %v1230 = vsel %vm1229, %v1110, %v1228
      %vm1231 = vcmask 1044484
      %v1232 = vsel %vm1231, %v1129, %v1230
      %vm1233 = vcmask 1045509
      %v1234 = vsel %vm1233, %v1148, %v1232
      %vm1235 = vcmask 1046534
      %v1236 = vsel %vm1235, %v1167, %v1234
      %vm1237 = vcmask 1047559
      %v1238 = vsel %vm1237, %v1186, %v1236
      %v1239 = vsel %vm1225, %v1224, %v1205
      %vm1242 = vcmask 261120
      %v1243 = vsel %vm1242, %v1238, 0.0
      %1244 = vadd.xlane.f32.xlu0 %v1243
      %v1245 = vpop.xlane.xlu0 %1244
      %vm1246 = vcmask 254976
      %v1247 = vsel %vm1246, %v1239, 0.0
      %1248 = vadd.xlane.f32.xlu0 %v1247
      %v1249 = vpop.xlane.xlu0 %1248
      %v1250 = vld [vmem:[%s4] sm:$0xff]
      %v1251 = vld [vmem:[%s4 + $0x8] sm:$0x3]
      %v1252 = vadd.f32 %v1245, %v1250
      %v1253 = vadd.f32 %v1249, %v1251
      %vm1254 = vcmask 7168
      %1255 = vst.msk [vmem:[%s224] sm:$0xff] %vm1254, %v1252
      %vm1256 = vcmask 1024
      %1257 = vst.msk [vmem:[%s224 + $0x8] sm:$0x3] %vm1256, %v1253
      %p1258 = scmp.lt.s32.totalorder %s16, 1
      %s1259 = scalar_select %p1258, %s16, 1
      %s1260 = smul.addr %s1259, 2
      %s1261 = smul.addr %s1260, 8
      %s1262 = scalar_lea.vmem %s5, %s1261
      // Predicated region
      $region41: #{simple_cnn_forward.3} parent=39 // pred_check
        %p1263 = pneg %p144
      $region42: #{simple_cnn_forward.3} parent=39 // pred_check_branch
        %1265 = sbr.rel (%p1263) target = $region44
      $region43: #{simple_cnn_forward.3} parent=39 // pred_region
        _
      $region44: #{simple_cnn_forward.3} parent=39 // pred_fallthru
        _
    $region40: #{simple_cnn_forward.3} parent=5 // pred_fallthru
      _
    %p1266 = scmp.le.s32.totalorder 2, %s11
    // Predicated region
    $region45: #{simple_cnn_forward.3} parent=5 // pred_check
      %p1267 = pneg %p1266
    $region46: #{simple_cnn_forward.3} parent=5 // pred_check_branch
      %1269 = sbr.rel (%p1267) target = $region48
    $region47: #{simple_cnn_forward.3} parent=5 // pred_region
      %s1270 = ssub.s32 %s11, 2
      // Predicated region
      $region49: #{simple_cnn_forward.3} parent=47 // pred_check
        %p1271 = pneg %p150
      $region50: #{simple_cnn_forward.3} parent=47 // pred_check_branch
        %1273 = sbr.rel (%p1271) target = $region52
      $region51: #{simple_cnn_forward.3} parent=47 // pred_region
        %p1274 = scmp.lt.s32.totalorder %s17, 1
        %s1275 = scalar_select %p1274, %s17, 1
        %s1276 = smul.addr %s1275, 2
        %s1277 = smul.addr %s1276, 8
        %s1278 = scalar_lea.vmem %s5, %s1277
      $region52: #{simple_cnn_forward.3} parent=47 // pred_fallthru
        _
    $region48: #{simple_cnn_forward.3} parent=5 // pred_fallthru
      _
  $region6: #{simple_cnn_forward.3} parent=0 // loop_footer
    %s15 = sadd.s32 1, %s11
  $region7: #{simple_cnn_forward.3} parent=0 // loop_footer_branch
    %10 = sbr.rel target = $region3
  $region8: #{simple_cnn_forward.3} parent=0 // loop_exit
    _

</llo_original>
